<compile_context>
chip_gen: v5e
topology: v5e:2x2
jax: 0.10.0
libtpu: 0.0.40
codegen_flags: <defaults>
</compile_context>

<pallas_src>
import functools

import numpy as np
import jax
import jax.numpy as jnp
from jax import lax
from jax.experimental import pallas as pl
from jax.experimental.pallas import tpu as pltpu


def _sigmoid(z):
    # exact sigmoid (exp on EUP), keeps 1e-4 agreement with the reference
    return 1.0 / (1.0 + jnp.exp(-z))


def cbam_kernel(x_ref, w1t_ref, w2t_ref, wma_ref, wmm_ref, o_ref, *, W, K):
    # x_ref / o_ref : (bb, C, HW) block (VMEM)
    # w1t_ref       : (C, hidden)   = fc[0].weight.T
    # w2t_ref       : (hidden, C)   = fc[2].weight.T
    # wma_ref/wmm_ref: (K*K, HW) per-tap conv-weight * boundary-mask rows
    #                 (avg-map channel / max-map channel)
    bb, C, HW = x_ref.shape
    p = K // 2
    inv_hw = 1.0 / float(HW)
    inv_c = 1.0 / float(C)

    xf = x_ref[...].astype(jnp.float32)                        # (bb, C, HW)

    # ---------------- channel attention (whole block at once) ----------------
    avg_p = jnp.sum(xf, axis=2) * inv_hw                        # (bb, C)
    max_p = jnp.max(xf, axis=2)                                 # (bb, C)

    w1t = w1t_ref[...].astype(jnp.float32)
    w2t = w2t_ref[...].astype(jnp.float32)
    h = (jnp.maximum(jnp.dot(avg_p, w1t, preferred_element_type=jnp.float32), 0.0)
         + jnp.maximum(jnp.dot(max_p, w1t, preferred_element_type=jnp.float32), 0.0))
    ca = _sigmoid(jnp.dot(h, w2t, preferred_element_type=jnp.float32))  # (bb, C)

    x1 = xf * ca[:, :, None]                                    # (bb, C, HW)

    # ---------------- spatial attention (whole block at once) ----------------
    s_avg = jnp.sum(x1, axis=1) * inv_c                         # (bb, HW)
    s_max = jnp.max(x1, axis=1)                                 # (bb, HW)

    # KxK "same" conv (2 in-ch -> 1) on the flat spatial axis: each tap is a
    # single static lane roll of the stacked pooled maps (one roll covers all
    # bb batch rows) times a precomputed weight*boundary mask.  Roll wraparound
    # and out-of-image taps are zeroed by the mask, so this matches a
    # zero-padded conv exactly — do NOT change the flattening / mask scheme
    # independently of each other.
    acc0 = jnp.zeros((bb, HW), jnp.float32)
    acc1 = jnp.zeros((bb, HW), jnp.float32)
    for ki in range(K):
        for kj in range(K):
            t = ki * K + kj
            delta = (ki - p) * W + (kj - p)
            shift = (-delta) % HW                               # static python int
            if shift == 0:
                ra, rm = s_avg, s_max
            else:
                ra = pltpu.roll(s_avg, shift=shift, axis=1)
                rm = pltpu.roll(s_max, shift=shift, axis=1)
            tap = ra * wma_ref[pl.ds(t, 1), :] + rm * wmm_ref[pl.ds(t, 1), :]
            if t % 2 == 0:
                acc0 = acc0 + tap
            else:
                acc1 = acc1 + tap
    att = _sigmoid(acc0 + acc1)                                  # (bb, HW)

    # fused final store: x * ca * att (no intermediate writeback of x1)
    o_ref[...] = (x1 * att[:, None, :]).astype(o_ref.dtype)


def cbam_pallas(x, w1, w2, wconv, *,
                block_bytes_budget=4 * 1024 * 1024,
                working_set_budget=40 * 1024 * 1024):
    B, C, H, W = x.shape
    HW = H * W
    K = wconv.shape[-1]
    hidden = w1.shape[0]
    p = K // 2

    # ---- host-side precompute: per-tap (conv weight * boundary mask) rows ----
    pos = np.arange(HW)
    row = pos // W
    col = pos % W
    mrows = []
    for ki in range(K):
        si = ki - p
        rok = (row + si >= 0) & (row + si < H)
        for kj in range(K):
            sj = kj - p
            cok = (col + sj >= 0) & (col + sj < W)
            mrows.append((rok & cok).astype(np.float32))
    mask = jnp.asarray(np.stack(mrows, axis=0))                 # (K*K, HW)
    wc = wconv.reshape(2, K * K, 1).astype(jnp.float32)
    wm_avg = mask * wc[0]                                       # (K*K, HW)
    wm_max = mask * wc[1]                                       # (K*K, HW)

    w1t = w1.T.astype(jnp.float32)                              # (C, hidden)
    w2t = w2.T.astype(jnp.float32)                              # (hidden, C)

    xf = x.reshape(B, C, HW)                                    # free reshape

    # ---- batch-block selection with an explicit VMEM working-set model ----
    itemsize = jnp.dtype(x.dtype).itemsize
    # per block element: input + output blocks double-buffered (2x each) plus
    # ~3 full-size f32 in-kernel temporaries (f32 cast, x*ca, final product)
    bytes_per_elem = 4 * itemsize + 3 * 4
    divs = [d for d in range(1, B + 1) if B % d == 0]
    fits = [d for d in divs
            if d * C * HW * itemsize <= block_bytes_budget
            and d * C * HW * bytes_per_elem <= working_set_budget]
    if not fits:
        fits = [1]
    # prefer an even number of grid steps >= 2 (v7x megacore), then largest bb
    even = [d for d in fits if (B // d) >= 2 and (B // d) % 2 == 0]
    multi = [d for d in fits if B // d >= 2]
    bb = max(even or multi or fits)
    grid = (B // bb,)

    const_bytes = 2 * 4 * (w1t.size + w2t.size + wm_avg.size + wm_max.size)
    working = bb * C * HW * bytes_per_elem + const_bytes + (2 << 20)
    # cap at 48 MiB so double-buffering stays alive on v7x (64 MiB VMEM / TC)
    vmem_limit = int(min(max(working, 16 << 20), 48 << 20))

    kernel = functools.partial(cbam_kernel, W=W, K=K)
    out = pl.pallas_call(
        kernel,
        out_shape=jax.ShapeDtypeStruct((B, C, HW), x.dtype),
        grid=grid,
        in_specs=[
            pl.BlockSpec((bb, C, HW), lambda b: (b, 0, 0)),
            pl.BlockSpec((C, hidden), lambda b: (0, 0)),
            pl.BlockSpec((hidden, C), lambda b: (0, 0)),
            pl.BlockSpec((K * K, HW), lambda b: (0, 0)),
            pl.BlockSpec((K * K, HW), lambda b: (0, 0)),
        ],
        out_specs=pl.BlockSpec((bb, C, HW), lambda b: (b, 0, 0)),
        compiler_params=pltpu.CompilerParams(
            dimension_semantics=("parallel",),
            vmem_limit_bytes=vmem_limit),
    )(xf, w1t, w2t, wm_avg, wm_max)

    return out.reshape(B, C, H, W)


def cbam_ref(x, w1, w2, wconv):
    # pure-JAX reference matching the PyTorch module (no biases in the module)
    avg = x.mean(axis=(2, 3))
    mx = x.max(axis=(2, 3))

    def fc(v):
        return jnp.maximum(v @ w1.T, 0.0) @ w2.T

    ca = jax.nn.sigmoid(fc(avg) + fc(mx))[:, :, None, None]
    x1 = x * ca
    s = jnp.concatenate([x1.mean(axis=1, keepdims=True),
                         x1.max(axis=1, keepdims=True)], axis=1)
    pad = wconv.shape[-1] // 2
    conv = lax.conv_general_dilated(
        s, wconv[None], window_strides=(1, 1),
        padding=[(pad, pad), (pad, pad)],
        dimension_numbers=("NCHW", "OIHW", "NCHW"))
    return x1 * jax.nn.sigmoid(conv)


if __name__ == "__main__":
    B, C, H, W = 2, 32, 16, 16
    reduction_ratio = 16          # CBAM default
    K = 5                         # CBAM default kernel_size
    hidden = C // reduction_ratio

    key = jax.random.PRNGKey(0)
    k1, k2, k3, k4 = jax.random.split(key, 4)
    x = jax.random.normal(k1, (B, C, H, W), dtype=jnp.float32)
    # deterministic synthetic parameters (shapes follow the nn.Module __init__)
    w1 = 0.3 * jax.random.normal(k2, (hidden, C), dtype=jnp.float32)   # fc[0].weight
    w2 = 0.3 * jax.random.normal(k3, (C, hidden), dtype=jnp.float32)   # fc[2].weight
    wconv = 0.3 * jax.random.normal(k4, (2, K, K), dtype=jnp.float32)  # conv1.weight[0]

    out = cbam_pallas(x, w1, w2, wconv)
    jax.block_until_ready(out)

    ref = cbam_ref(x, w1, w2, wconv)
    np.testing.assert_allclose(np.asarray(out), np.asarray(ref),
                               rtol=1e-4, atol=1e-4)
    print("KERNEL_OK")
</pallas_src>

<mosaic_0001>
module attributes {stable_mosaic.version = 11 : i64} {
  func.func @cbam_kernel(%arg0: i32, %arg1: memref<1x32x256xf32, #tpu.memory_space<vmem>>, %arg2: memref<32x2xf32, #tpu.memory_space<vmem>>, %arg3: memref<2x32xf32, #tpu.memory_space<vmem>>, %arg4: memref<25x256xf32, #tpu.memory_space<vmem>>, %arg5: memref<25x256xf32, #tpu.memory_space<vmem>>, %arg6: memref<1x32x256xf32, #tpu.memory_space<vmem>>) attributes {dimension_semantics = [#tpu.dimension_semantics<parallel>], iteration_bounds = array<i64: 2>, scalar_prefetch = 0 : i64, scratch_operands = 0 : i64, tpu.core_type = #tpu.core_type<tc>, window_params = [{transform_indices = @transform_0, window_bounds = array<i64: 1, 32, 256>}, {pipeline_mode = #tpu.pipeline_mode<synchronous>, transform_indices = @transform_1, window_bounds = array<i64: 32, 2>}, {pipeline_mode = #tpu.pipeline_mode<synchronous>, transform_indices = @transform_2, window_bounds = array<i64: 2, 32>}, {pipeline_mode = #tpu.pipeline_mode<synchronous>, transform_indices = @transform_3, window_bounds = array<i64: 25, 256>}, {pipeline_mode = #tpu.pipeline_mode<synchronous>, transform_indices = @transform_4, window_bounds = array<i64: 25, 256>}, {transform_indices = @transform_5, window_bounds = array<i64: 1, 32, 256>}]} {
    %c0 = arith.constant 0 : index
    %c0_0 = arith.constant 0 : index
    %c0_1 = arith.constant 0 : index
    %0 = vector.load %arg1[%c0, %c0_0, %c0_1] : memref<1x32x256xf32, #tpu.memory_space<vmem>>, vector<1x32x256xf32>
    %cst = arith.constant dense<0.000000e+00> : vector<1x32xf32>
    %1 = vector.multi_reduction <add>, %0, %cst [2] : vector<1x32x256xf32> to vector<1x32xf32>
    %cst_2 = arith.constant 3.906250e-03 : f32
    %2 = vector.broadcast %cst_2 : f32 to vector<1x32xf32>
    %3 = arith.mulf %1, %2 : vector<1x32xf32>
    %cst_3 = arith.constant dense<0xFF800000> : vector<1x32xf32>
    %4 = vector.multi_reduction <maximumf>, %0, %cst_3 [2] : vector<1x32x256xf32> to vector<1x32xf32>
    %c0_4 = arith.constant 0 : index
    %c0_5 = arith.constant 0 : index
    %5 = vector.load %arg2[%c0_4, %c0_5] : memref<32x2xf32, #tpu.memory_space<vmem>>, vector<32x2xf32>
    %c0_6 = arith.constant 0 : index
    %c0_7 = arith.constant 0 : index
    %6 = vector.load %arg3[%c0_6, %c0_7] : memref<2x32xf32, #tpu.memory_space<vmem>>, vector<2x32xf32>
    %cst_8 = arith.constant dense<0.000000e+00> : vector<1x2xf32>
    %7 = tpu.matmul %3, %5, %cst_8 {dimension_numbers = #tpu.dot_dimension_numbers<[1], [0], [0], [1], [0, 0, 1, 1], [], []>} : vector<1x32xf32>, vector<32x2xf32>, vector<1x2xf32> -> vector<1x2xf32>
    %cst_9 = arith.constant 0.000000e+00 : f32
    %8 = vector.broadcast %cst_9 : f32 to vector<1x2xf32>
    %9 = arith.maximumf %7, %8 : vector<1x2xf32>
    %cst_10 = arith.constant dense<0.000000e+00> : vector<1x2xf32>
    %10 = tpu.matmul %4, %5, %cst_10 {dimension_numbers = #tpu.dot_dimension_numbers<[1], [0], [0], [1], [0, 0, 1, 1], [], []>} : vector<1x32xf32>, vector<32x2xf32>, vector<1x2xf32> -> vector<1x2xf32>
    %cst_11 = arith.constant 0.000000e+00 : f32
    %11 = vector.broadcast %cst_11 : f32 to vector<1x2xf32>
    %12 = arith.maximumf %10, %11 : vector<1x2xf32>
    %13 = arith.addf %9, %12 : vector<1x2xf32>
    %cst_12 = arith.constant dense<0.000000e+00> : vector<1x32xf32>
    %14 = tpu.matmul %13, %6, %cst_12 {dimension_numbers = #tpu.dot_dimension_numbers<[1], [0], [0], [1], [0, 0, 1, 1], [], []>} : vector<1x2xf32>, vector<2x32xf32>, vector<1x32xf32> -> vector<1x32xf32>
    %cst_13 = arith.constant 0.000000e+00 : f32
    %15 = vector.broadcast %cst_13 : f32 to vector<1x32xf32>
    %16 = arith.subf %15, %14 : vector<1x32xf32>
    %17 = math.exp %16 : vector<1x32xf32>
    %cst_14 = arith.constant 1.000000e+00 : f32
    %18 = vector.broadcast %cst_14 : f32 to vector<1x32xf32>
    %19 = arith.addf %18, %17 : vector<1x32xf32>
    %cst_15 = arith.constant 1.000000e+00 : f32
    %20 = vector.broadcast %cst_15 : f32 to vector<1x32xf32>
    %21 = arith.divf %20, %19 : vector<1x32xf32>
    %22 = vector.shape_cast %21 : vector<1x32xf32> to vector<1x32x1xf32>
    %23 = vector.broadcast %22 : vector<1x32x1xf32> to vector<1x32x256xf32>
    %24 = arith.mulf %0, %23 : vector<1x32x256xf32>
    %cst_16 = arith.constant dense<0.000000e+00> : vector<1x256xf32>
    %25 = vector.multi_reduction <add>, %24, %cst_16 [1] : vector<1x32x256xf32> to vector<1x256xf32>
    %cst_17 = arith.constant 3.125000e-02 : f32
    %26 = vector.broadcast %cst_17 : f32 to vector<1x256xf32>
    %27 = arith.mulf %25, %26 : vector<1x256xf32>
    %cst_18 = arith.constant dense<0xFF800000> : vector<1x256xf32>
    %28 = vector.multi_reduction <maximumf>, %24, %cst_18 [1] : vector<1x32x256xf32> to vector<1x256xf32>
    %cst_19 = arith.constant 0.000000e+00 : f32
    %29 = vector.broadcast %cst_19 : f32 to vector<1x256xf32>
    %cst_20 = arith.constant 0.000000e+00 : f32
    %30 = vector.broadcast %cst_20 : f32 to vector<1x256xf32>
    %c34_i32 = arith.constant 34 : i32
    %31 = tpu.dynamic_rotate %27 by %c34_i32 dim 1 : vector<1x256xf32>, i32 -> vector<1x256xf32>
    %c34_i32_21 = arith.constant 34 : i32
    %32 = tpu.dynamic_rotate %28 by %c34_i32_21 dim 1 : vector<1x256xf32>, i32 -> vector<1x256xf32>
    %c0_22 = arith.constant 0 : index
    %c0_23 = arith.constant 0 : index
    %33 = vector.load %arg4[%c0_22, %c0_23] : memref<25x256xf32, #tpu.memory_space<vmem>>, vector<1x256xf32>
    %34 = arith.mulf %31, %33 : vector<1x256xf32>
    %c0_24 = arith.constant 0 : index
    %c0_25 = arith.constant 0 : index
    %35 = vector.load %arg5[%c0_24, %c0_25] : memref<25x256xf32, #tpu.memory_space<vmem>>, vector<1x256xf32>
    %36 = arith.mulf %32, %35 : vector<1x256xf32>
    %37 = arith.addf %34, %36 : vector<1x256xf32>
    %38 = arith.addf %29, %37 : vector<1x256xf32>
    %c33_i32 = arith.constant 33 : i32
    %39 = tpu.dynamic_rotate %27 by %c33_i32 dim 1 : vector<1x256xf32>, i32 -> vector<1x256xf32>
    %c33_i32_26 = arith.constant 33 : i32
    %40 = tpu.dynamic_rotate %28 by %c33_i32_26 dim 1 : vector<1x256xf32>, i32 -> vector<1x256xf32>
    %c1 = arith.constant 1 : index
    %c0_27 = arith.constant 0 : index
    %41 = vector.load %arg4[%c1, %c0_27] : memref<25x256xf32, #tpu.memory_space<vmem>>, vector<1x256xf32>
    %42 = arith.mulf %39, %41 : vector<1x256xf32>
    %c1_28 = arith.constant 1 : index
    %c0_29 = arith.constant 0 : index
    %43 = vector.load %arg5[%c1_28, %c0_29] : memref<25x256xf32, #tpu.memory_space<vmem>>, vector<1x256xf32>
    %44 = arith.mulf %40, %43 : vector<1x256xf32>
    %45 = arith.addf %42, %44 : vector<1x256xf32>
    %46 = arith.addf %30, %45 : vector<1x256xf32>
    %c32_i32 = arith.constant 32 : i32
    %47 = tpu.dynamic_rotate %27 by %c32_i32 dim 1 : vector<1x256xf32>, i32 -> vector<1x256xf32>
    %c32_i32_30 = arith.constant 32 : i32
    %48 = tpu.dynamic_rotate %28 by %c32_i32_30 dim 1 : vector<1x256xf32>, i32 -> vector<1x256xf32>
    %c2 = arith.constant 2 : index
    %c0_31 = arith.constant 0 : index
    %49 = vector.load %arg4[%c2, %c0_31] : memref<25x256xf32, #tpu.memory_space<vmem>>, vector<1x256xf32>
    %50 = arith.mulf %47, %49 : vector<1x256xf32>
    %c2_32 = arith.constant 2 : index
    %c0_33 = arith.constant 0 : index
    %51 = vector.load %arg5[%c2_32, %c0_33] : memref<25x256xf32, #tpu.memory_space<vmem>>, vector<1x256xf32>
    %52 = arith.mulf %48, %51 : vector<1x256xf32>
    %53 = arith.addf %50, %52 : vector<1x256xf32>
    %54 = arith.addf %38, %53 : vector<1x256xf32>
    %c31_i32 = arith.constant 31 : i32
    %55 = tpu.dynamic_rotate %27 by %c31_i32 dim 1 : vector<1x256xf32>, i32 -> vector<1x256xf32>
    %c31_i32_34 = arith.constant 31 : i32
    %56 = tpu.dynamic_rotate %28 by %c31_i32_34 dim 1 : vector<1x256xf32>, i32 -> vector<1x256xf32>
    %c3 = arith.constant 3 : index
    %c0_35 = arith.constant 0 : index
    %57 = vector.load %arg4[%c3, %c0_35] : memref<25x256xf32, #tpu.memory_space<vmem>>, vector<1x256xf32>
    %58 = arith.mulf %55, %57 : vector<1x256xf32>
    %c3_36 = arith.constant 3 : index
    %c0_37 = arith.constant 0 : index
    %59 = vector.load %arg5[%c3_36, %c0_37] : memref<25x256xf32, #tpu.memory_space<vmem>>, vector<1x256xf32>
    %60 = arith.mulf %56, %59 : vector<1x256xf32>
    %61 = arith.addf %58, %60 : vector<1x256xf32>
    %62 = arith.addf %46, %61 : vector<1x256xf32>
    %c30_i32 = arith.constant 30 : i32
    %63 = tpu.dynamic_rotate %27 by %c30_i32 dim 1 : vector<1x256xf32>, i32 -> vector<1x256xf32>
    %c30_i32_38 = arith.constant 30 : i32
    %64 = tpu.dynamic_rotate %28 by %c30_i32_38 dim 1 : vector<1x256xf32>, i32 -> vector<1x256xf32>
    %c4 = arith.constant 4 : index
    %c0_39 = arith.constant 0 : index
    %65 = vector.load %arg4[%c4, %c0_39] : memref<25x256xf32, #tpu.memory_space<vmem>>, vector<1x256xf32>
    %66 = arith.mulf %63, %65 : vector<1x256xf32>
    %c4_40 = arith.constant 4 : index
    %c0_41 = arith.constant 0 : index
    %67 = vector.load %arg5[%c4_40, %c0_41] : memref<25x256xf32, #tpu.memory_space<vmem>>, vector<1x256xf32>
    %68 = arith.mulf %64, %67 : vector<1x256xf32>
    %69 = arith.addf %66, %68 : vector<1x256xf32>
    %70 = arith.addf %54, %69 : vector<1x256xf32>
    %c18_i32 = arith.constant 18 : i32
    %71 = tpu.dynamic_rotate %27 by %c18_i32 dim 1 : vector<1x256xf32>, i32 -> vector<1x256xf32>
    %c18_i32_42 = arith.constant 18 : i32
    %72 = tpu.dynamic_rotate %28 by %c18_i32_42 dim 1 : vector<1x256xf32>, i32 -> vector<1x256xf32>
    %c5 = arith.constant 5 : index
    %c0_43 = arith.constant 0 : index
    %73 = vector.load %arg4[%c5, %c0_43] : memref<25x256xf32, #tpu.memory_space<vmem>>, vector<1x256xf32>
    %74 = arith.mulf %71, %73 : vector<1x256xf32>
    %c5_44 = arith.constant 5 : index
    %c0_45 = arith.constant 0 : index
    %75 = vector.load %arg5[%c5_44, %c0_45] : memref<25x256xf32, #tpu.memory_space<vmem>>, vector<1x256xf32>
    %76 = arith.mulf %72, %75 : vector<1x256xf32>
    %77 = arith.addf %74, %76 : vector<1x256xf32>
    %78 = arith.addf %62, %77 : vector<1x256xf32>
    %c17_i32 = arith.constant 17 : i32
    %79 = tpu.dynamic_rotate %27 by %c17_i32 dim 1 : vector<1x256xf32>, i32 -> vector<1x256xf32>
    %c17_i32_46 = arith.constant 17 : i32
    %80 = tpu.dynamic_rotate %28 by %c17_i32_46 dim 1 : vector<1x256xf32>, i32 -> vector<1x256xf32>
    %c6 = arith.constant 6 : index
    %c0_47 = arith.constant 0 : index
    %81 = vector.load %arg4[%c6, %c0_47] : memref<25x256xf32, #tpu.memory_space<vmem>>, vector<1x256xf32>
    %82 = arith.mulf %79, %81 : vector<1x256xf32>
    %c6_48 = arith.constant 6 : index
    %c0_49 = arith.constant 0 : index
    %83 = vector.load %arg5[%c6_48, %c0_49] : memref<25x256xf32, #tpu.memory_space<vmem>>, vector<1x256xf32>
    %84 = arith.mulf %80, %83 : vector<1x256xf32>
    %85 = arith.addf %82, %84 : vector<1x256xf32>
    %86 = arith.addf %70, %85 : vector<1x256xf32>
    %c16_i32 = arith.constant 16 : i32
    %87 = tpu.dynamic_rotate %27 by %c16_i32 dim 1 : vector<1x256xf32>, i32 -> vector<1x256xf32>
    %c16_i32_50 = arith.constant 16 : i32
    %88 = tpu.dynamic_rotate %28 by %c16_i32_50 dim 1 : vector<1x256xf32>, i32 -> vector<1x256xf32>
    %c7 = arith.constant 7 : index
    %c0_51 = arith.constant 0 : index
    %89 = vector.load %arg4[%c7, %c0_51] : memref<25x256xf32, #tpu.memory_space<vmem>>, vector<1x256xf32>
    %90 = arith.mulf %87, %89 : vector<1x256xf32>
    %c7_52 = arith.constant 7 : index
    %c0_53 = arith.constant 0 : index
    %91 = vector.load %arg5[%c7_52, %c0_53] : memref<25x256xf32, #tpu.memory_space<vmem>>, vector<1x256xf32>
    %92 = arith.mulf %88, %91 : vector<1x256xf32>
    %93 = arith.addf %90, %92 : vector<1x256xf32>
    %94 = arith.addf %78, %93 : vector<1x256xf32>
    %c15_i32 = arith.constant 15 : i32
    %95 = tpu.dynamic_rotate %27 by %c15_i32 dim 1 : vector<1x256xf32>, i32 -> vector<1x256xf32>
    %c15_i32_54 = arith.constant 15 : i32
    %96 = tpu.dynamic_rotate %28 by %c15_i32_54 dim 1 : vector<1x256xf32>, i32 -> vector<1x256xf32>
    %c8 = arith.constant 8 : index
    %c0_55 = arith.constant 0 : index
    %97 = vector.load %arg4[%c8, %c0_55] : memref<25x256xf32, #tpu.memory_space<vmem>>, vector<1x256xf32>
    %98 = arith.mulf %95, %97 : vector<1x256xf32>
    %c8_56 = arith.constant 8 : index
    %c0_57 = arith.constant 0 : index
    %99 = vector.load %arg5[%c8_56, %c0_57] : memref<25x256xf32, #tpu.memory_space<vmem>>, vector<1x256xf32>
    %100 = arith.mulf %96, %99 : vector<1x256xf32>
    %101 = arith.addf %98, %100 : vector<1x256xf32>
    %102 = arith.addf %86, %101 : vector<1x256xf32>
    %c14_i32 = arith.constant 14 : i32
    %103 = tpu.dynamic_rotate %27 by %c14_i32 dim 1 : vector<1x256xf32>, i32 -> vector<1x256xf32>
    %c14_i32_58 = arith.constant 14 : i32
    %104 = tpu.dynamic_rotate %28 by %c14_i32_58 dim 1 : vector<1x256xf32>, i32 -> vector<1x256xf32>
    %c9 = arith.constant 9 : index
    %c0_59 = arith.constant 0 : index
    %105 = vector.load %arg4[%c9, %c0_59] : memref<25x256xf32, #tpu.memory_space<vmem>>, vector<1x256xf32>
    %106 = arith.mulf %103, %105 : vector<1x256xf32>
    %c9_60 = arith.constant 9 : index
    %c0_61 = arith.constant 0 : index
    %107 = vector.load %arg5[%c9_60, %c0_61] : memref<25x256xf32, #tpu.memory_space<vmem>>, vector<1x256xf32>
    %108 = arith.mulf %104, %107 : vector<1x256xf32>
    %109 = arith.addf %106, %108 : vector<1x256xf32>
    %110 = arith.addf %94, %109 : vector<1x256xf32>
    %c2_i32 = arith.constant 2 : i32
    %111 = tpu.dynamic_rotate %27 by %c2_i32 dim 1 : vector<1x256xf32>, i32 -> vector<1x256xf32>
    %c2_i32_62 = arith.constant 2 : i32
    %112 = tpu.dynamic_rotate %28 by %c2_i32_62 dim 1 : vector<1x256xf32>, i32 -> vector<1x256xf32>
    %c10 = arith.constant 10 : index
    %c0_63 = arith.constant 0 : index
    %113 = vector.load %arg4[%c10, %c0_63] : memref<25x256xf32, #tpu.memory_space<vmem>>, vector<1x256xf32>
    %114 = arith.mulf %111, %113 : vector<1x256xf32>
    %c10_64 = arith.constant 10 : index
    %c0_65 = arith.constant 0 : index
    %115 = vector.load %arg5[%c10_64, %c0_65] : memref<25x256xf32, #tpu.memory_space<vmem>>, vector<1x256xf32>
    %116 = arith.mulf %112, %115 : vector<1x256xf32>
    %117 = arith.addf %114, %116 : vector<1x256xf32>
    %118 = arith.addf %102, %117 : vector<1x256xf32>
    %c1_i32 = arith.constant 1 : i32
    %119 = tpu.dynamic_rotate %27 by %c1_i32 dim 1 : vector<1x256xf32>, i32 -> vector<1x256xf32>
    %c1_i32_66 = arith.constant 1 : i32
    %120 = tpu.dynamic_rotate %28 by %c1_i32_66 dim 1 : vector<1x256xf32>, i32 -> vector<1x256xf32>
    %c11 = arith.constant 11 : index
    %c0_67 = arith.constant 0 : index
    %121 = vector.load %arg4[%c11, %c0_67] : memref<25x256xf32, #tpu.memory_space<vmem>>, vector<1x256xf32>
    %122 = arith.mulf %119, %121 : vector<1x256xf32>
    %c11_68 = arith.constant 11 : index
    %c0_69 = arith.constant 0 : index
    %123 = vector.load %arg5[%c11_68, %c0_69] : memref<25x256xf32, #tpu.memory_space<vmem>>, vector<1x256xf32>
    %124 = arith.mulf %120, %123 : vector<1x256xf32>
    %125 = arith.addf %122, %124 : vector<1x256xf32>
    %126 = arith.addf %110, %125 : vector<1x256xf32>
    %c12 = arith.constant 12 : index
    %c0_70 = arith.constant 0 : index
    %127 = vector.load %arg4[%c12, %c0_70] : memref<25x256xf32, #tpu.memory_space<vmem>>, vector<1x256xf32>
    %128 = arith.mulf %27, %127 : vector<1x256xf32>
    %c12_71 = arith.constant 12 : index
    %c0_72 = arith.constant 0 : index
    %129 = vector.load %arg5[%c12_71, %c0_72] : memref<25x256xf32, #tpu.memory_space<vmem>>, vector<1x256xf32>
    %130 = arith.mulf %28, %129 : vector<1x256xf32>
    %131 = arith.addf %128, %130 : vector<1x256xf32>
    %132 = arith.addf %118, %131 : vector<1x256xf32>
    %c255_i32 = arith.constant 255 : i32
    %133 = tpu.dynamic_rotate %27 by %c255_i32 dim 1 : vector<1x256xf32>, i32 -> vector<1x256xf32>
    %c255_i32_73 = arith.constant 255 : i32
    %134 = tpu.dynamic_rotate %28 by %c255_i32_73 dim 1 : vector<1x256xf32>, i32 -> vector<1x256xf32>
    %c13 = arith.constant 13 : index
    %c0_74 = arith.constant 0 : index
    %135 = vector.load %arg4[%c13, %c0_74] : memref<25x256xf32, #tpu.memory_space<vmem>>, vector<1x256xf32>
    %136 = arith.mulf %133, %135 : vector<1x256xf32>
    %c13_75 = arith.constant 13 : index
    %c0_76 = arith.constant 0 : index
    %137 = vector.load %arg5[%c13_75, %c0_76] : memref<25x256xf32, #tpu.memory_space<vmem>>, vector<1x256xf32>
    %138 = arith.mulf %134, %137 : vector<1x256xf32>
    %139 = arith.addf %136, %138 : vector<1x256xf32>
    %140 = arith.addf %126, %139 : vector<1x256xf32>
    %c254_i32 = arith.constant 254 : i32
    %141 = tpu.dynamic_rotate %27 by %c254_i32 dim 1 : vector<1x256xf32>, i32 -> vector<1x256xf32>
    %c254_i32_77 = arith.constant 254 : i32
    %142 = tpu.dynamic_rotate %28 by %c254_i32_77 dim 1 : vector<1x256xf32>, i32 -> vector<1x256xf32>
    %c14 = arith.constant 14 : index
    %c0_78 = arith.constant 0 : index
    %143 = vector.load %arg4[%c14, %c0_78] : memref<25x256xf32, #tpu.memory_space<vmem>>, vector<1x256xf32>
    %144 = arith.mulf %141, %143 : vector<1x256xf32>
    %c14_79 = arith.constant 14 : index
    %c0_80 = arith.constant 0 : index
    %145 = vector.load %arg5[%c14_79, %c0_80] : memref<25x256xf32, #tpu.memory_space<vmem>>, vector<1x256xf32>
    %146 = arith.mulf %142, %145 : vector<1x256xf32>
    %147 = arith.addf %144, %146 : vector<1x256xf32>
    %148 = arith.addf %132, %147 : vector<1x256xf32>
    %c242_i32 = arith.constant 242 : i32
    %149 = tpu.dynamic_rotate %27 by %c242_i32 dim 1 : vector<1x256xf32>, i32 -> vector<1x256xf32>
    %c242_i32_81 = arith.constant 242 : i32
    %150 = tpu.dynamic_rotate %28 by %c242_i32_81 dim 1 : vector<1x256xf32>, i32 -> vector<1x256xf32>
    %c15 = arith.constant 15 : index
    %c0_82 = arith.constant 0 : index
    %151 = vector.load %arg4[%c15, %c0_82] : memref<25x256xf32, #tpu.memory_space<vmem>>, vector<1x256xf32>
    %152 = arith.mulf %149, %151 : vector<1x256xf32>
    %c15_83 = arith.constant 15 : index
    %c0_84 = arith.constant 0 : index
    %153 = vector.load %arg5[%c15_83, %c0_84] : memref<25x256xf32, #tpu.memory_space<vmem>>, vector<1x256xf32>
    %154 = arith.mulf %150, %153 : vector<1x256xf32>
    %155 = arith.addf %152, %154 : vector<1x256xf32>
    %156 = arith.addf %140, %155 : vector<1x256xf32>
    %c241_i32 = arith.constant 241 : i32
    %157 = tpu.dynamic_rotate %27 by %c241_i32 dim 1 : vector<1x256xf32>, i32 -> vector<1x256xf32>
    %c241_i32_85 = arith.constant 241 : i32
    %158 = tpu.dynamic_rotate %28 by %c241_i32_85 dim 1 : vector<1x256xf32>, i32 -> vector<1x256xf32>
    %c16 = arith.constant 16 : index
    %c0_86 = arith.constant 0 : index
    %159 = vector.load %arg4[%c16, %c0_86] : memref<25x256xf32, #tpu.memory_space<vmem>>, vector<1x256xf32>
    %160 = arith.mulf %157, %159 : vector<1x256xf32>
    %c16_87 = arith.constant 16 : index
    %c0_88 = arith.constant 0 : index
    %161 = vector.load %arg5[%c16_87, %c0_88] : memref<25x256xf32, #tpu.memory_space<vmem>>, vector<1x256xf32>
    %162 = arith.mulf %158, %161 : vector<1x256xf32>
    %163 = arith.addf %160, %162 : vector<1x256xf32>
    %164 = arith.addf %148, %163 : vector<1x256xf32>
    %c240_i32 = arith.constant 240 : i32
    %165 = tpu.dynamic_rotate %27 by %c240_i32 dim 1 : vector<1x256xf32>, i32 -> vector<1x256xf32>
    %c240_i32_89 = arith.constant 240 : i32
    %166 = tpu.dynamic_rotate %28 by %c240_i32_89 dim 1 : vector<1x256xf32>, i32 -> vector<1x256xf32>
    %c17 = arith.constant 17 : index
    %c0_90 = arith.constant 0 : index
    %167 = vector.load %arg4[%c17, %c0_90] : memref<25x256xf32, #tpu.memory_space<vmem>>, vector<1x256xf32>
    %168 = arith.mulf %165, %167 : vector<1x256xf32>
    %c17_91 = arith.constant 17 : index
    %c0_92 = arith.constant 0 : index
    %169 = vector.load %arg5[%c17_91, %c0_92] : memref<25x256xf32, #tpu.memory_space<vmem>>, vector<1x256xf32>
    %170 = arith.mulf %166, %169 : vector<1x256xf32>
    %171 = arith.addf %168, %170 : vector<1x256xf32>
    %172 = arith.addf %156, %171 : vector<1x256xf32>
    %c239_i32 = arith.constant 239 : i32
    %173 = tpu.dynamic_rotate %27 by %c239_i32 dim 1 : vector<1x256xf32>, i32 -> vector<1x256xf32>
    %c239_i32_93 = arith.constant 239 : i32
    %174 = tpu.dynamic_rotate %28 by %c239_i32_93 dim 1 : vector<1x256xf32>, i32 -> vector<1x256xf32>
    %c18 = arith.constant 18 : index
    %c0_94 = arith.constant 0 : index
    %175 = vector.load %arg4[%c18, %c0_94] : memref<25x256xf32, #tpu.memory_space<vmem>>, vector<1x256xf32>
    %176 = arith.mulf %173, %175 : vector<1x256xf32>
    %c18_95 = arith.constant 18 : index
    %c0_96 = arith.constant 0 : index
    %177 = vector.load %arg5[%c18_95, %c0_96] : memref<25x256xf32, #tpu.memory_space<vmem>>, vector<1x256xf32>
    %178 = arith.mulf %174, %177 : vector<1x256xf32>
    %179 = arith.addf %176, %178 : vector<1x256xf32>
    %180 = arith.addf %164, %179 : vector<1x256xf32>
    %c238_i32 = arith.constant 238 : i32
    %181 = tpu.dynamic_rotate %27 by %c238_i32 dim 1 : vector<1x256xf32>, i32 -> vector<1x256xf32>
    %c238_i32_97 = arith.constant 238 : i32
    %182 = tpu.dynamic_rotate %28 by %c238_i32_97 dim 1 : vector<1x256xf32>, i32 -> vector<1x256xf32>
    %c19 = arith.constant 19 : index
    %c0_98 = arith.constant 0 : index
    %183 = vector.load %arg4[%c19, %c0_98] : memref<25x256xf32, #tpu.memory_space<vmem>>, vector<1x256xf32>
    %184 = arith.mulf %181, %183 : vector<1x256xf32>
    %c19_99 = arith.constant 19 : index
    %c0_100 = arith.constant 0 : index
    %185 = vector.load %arg5[%c19_99, %c0_100] : memref<25x256xf32, #tpu.memory_space<vmem>>, vector<1x256xf32>
    %186 = arith.mulf %182, %185 : vector<1x256xf32>
    %187 = arith.addf %184, %186 : vector<1x256xf32>
    %188 = arith.addf %172, %187 : vector<1x256xf32>
    %c226_i32 = arith.constant 226 : i32
    %189 = tpu.dynamic_rotate %27 by %c226_i32 dim 1 : vector<1x256xf32>, i32 -> vector<1x256xf32>
    %c226_i32_101 = arith.constant 226 : i32
    %190 = tpu.dynamic_rotate %28 by %c226_i32_101 dim 1 : vector<1x256xf32>, i32 -> vector<1x256xf32>
    %c20 = arith.constant 20 : index
    %c0_102 = arith.constant 0 : index
    %191 = vector.load %arg4[%c20, %c0_102] : memref<25x256xf32, #tpu.memory_space<vmem>>, vector<1x256xf32>
    %192 = arith.mulf %189, %191 : vector<1x256xf32>
    %c20_103 = arith.constant 20 : index
    %c0_104 = arith.constant 0 : index
    %193 = vector.load %arg5[%c20_103, %c0_104] : memref<25x256xf32, #tpu.memory_space<vmem>>, vector<1x256xf32>
    %194 = arith.mulf %190, %193 : vector<1x256xf32>
    %195 = arith.addf %192, %194 : vector<1x256xf32>
    %196 = arith.addf %180, %195 : vector<1x256xf32>
    %c225_i32 = arith.constant 225 : i32
    %197 = tpu.dynamic_rotate %27 by %c225_i32 dim 1 : vector<1x256xf32>, i32 -> vector<1x256xf32>
    %c225_i32_105 = arith.constant 225 : i32
    %198 = tpu.dynamic_rotate %28 by %c225_i32_105 dim 1 : vector<1x256xf32>, i32 -> vector<1x256xf32>
    %c21 = arith.constant 21 : index
    %c0_106 = arith.constant 0 : index
    %199 = vector.load %arg4[%c21, %c0_106] : memref<25x256xf32, #tpu.memory_space<vmem>>, vector<1x256xf32>
    %200 = arith.mulf %197, %199 : vector<1x256xf32>
    %c21_107 = arith.constant 21 : index
    %c0_108 = arith.constant 0 : index
    %201 = vector.load %arg5[%c21_107, %c0_108] : memref<25x256xf32, #tpu.memory_space<vmem>>, vector<1x256xf32>
    %202 = arith.mulf %198, %201 : vector<1x256xf32>
    %203 = arith.addf %200, %202 : vector<1x256xf32>
    %204 = arith.addf %188, %203 : vector<1x256xf32>
    %c224_i32 = arith.constant 224 : i32
    %205 = tpu.dynamic_rotate %27 by %c224_i32 dim 1 : vector<1x256xf32>, i32 -> vector<1x256xf32>
    %c224_i32_109 = arith.constant 224 : i32
    %206 = tpu.dynamic_rotate %28 by %c224_i32_109 dim 1 : vector<1x256xf32>, i32 -> vector<1x256xf32>
    %c22 = arith.constant 22 : index
    %c0_110 = arith.constant 0 : index
    %207 = vector.load %arg4[%c22, %c0_110] : memref<25x256xf32, #tpu.memory_space<vmem>>, vector<1x256xf32>
    %208 = arith.mulf %205, %207 : vector<1x256xf32>
    %c22_111 = arith.constant 22 : index
    %c0_112 = arith.constant 0 : index
    %209 = vector.load %arg5[%c22_111, %c0_112] : memref<25x256xf32, #tpu.memory_space<vmem>>, vector<1x256xf32>
    %210 = arith.mulf %206, %209 : vector<1x256xf32>
    %211 = arith.addf %208, %210 : vector<1x256xf32>
    %212 = arith.addf %196, %211 : vector<1x256xf32>
    %c223_i32 = arith.constant 223 : i32
    %213 = tpu.dynamic_rotate %27 by %c223_i32 dim 1 : vector<1x256xf32>, i32 -> vector<1x256xf32>
    %c223_i32_113 = arith.constant 223 : i32
    %214 = tpu.dynamic_rotate %28 by %c223_i32_113 dim 1 : vector<1x256xf32>, i32 -> vector<1x256xf32>
    %c23 = arith.constant 23 : index
    %c0_114 = arith.constant 0 : index
    %215 = vector.load %arg4[%c23, %c0_114] : memref<25x256xf32, #tpu.memory_space<vmem>>, vector<1x256xf32>
    %216 = arith.mulf %213, %215 : vector<1x256xf32>
    %c23_115 = arith.constant 23 : index
    %c0_116 = arith.constant 0 : index
    %217 = vector.load %arg5[%c23_115, %c0_116] : memref<25x256xf32, #tpu.memory_space<vmem>>, vector<1x256xf32>
    %218 = arith.mulf %214, %217 : vector<1x256xf32>
    %219 = arith.addf %216, %218 : vector<1x256xf32>
    %220 = arith.addf %204, %219 : vector<1x256xf32>
    %c222_i32 = arith.constant 222 : i32
    %221 = tpu.dynamic_rotate %27 by %c222_i32 dim 1 : vector<1x256xf32>, i32 -> vector<1x256xf32>
    %c222_i32_117 = arith.constant 222 : i32
    %222 = tpu.dynamic_rotate %28 by %c222_i32_117 dim 1 : vector<1x256xf32>, i32 -> vector<1x256xf32>
    %c24 = arith.constant 24 : index
    %c0_118 = arith.constant 0 : index
    %223 = vector.load %arg4[%c24, %c0_118] : memref<25x256xf32, #tpu.memory_space<vmem>>, vector<1x256xf32>
    %224 = arith.mulf %221, %223 : vector<1x256xf32>
    %c24_119 = arith.constant 24 : index
    %c0_120 = arith.constant 0 : index
    %225 = vector.load %arg5[%c24_119, %c0_120] : memref<25x256xf32, #tpu.memory_space<vmem>>, vector<1x256xf32>
    %226 = arith.mulf %222, %225 : vector<1x256xf32>
    %227 = arith.addf %224, %226 : vector<1x256xf32>
    %228 = arith.addf %212, %227 : vector<1x256xf32>
    %229 = arith.addf %228, %220 : vector<1x256xf32>
    %cst_121 = arith.constant 0.000000e+00 : f32
    %230 = vector.broadcast %cst_121 : f32 to vector<1x256xf32>
    %231 = arith.subf %230, %229 : vector<1x256xf32>
    %232 = math.exp %231 : vector<1x256xf32>
    %cst_122 = arith.constant 1.000000e+00 : f32
    %233 = vector.broadcast %cst_122 : f32 to vector<1x256xf32>
    %234 = arith.addf %233, %232 : vector<1x256xf32>
    %cst_123 = arith.constant 1.000000e+00 : f32
    %235 = vector.broadcast %cst_123 : f32 to vector<1x256xf32>
    %236 = arith.divf %235, %234 : vector<1x256xf32>
    %237 = vector.shape_cast %236 : vector<1x256xf32> to vector<1x1x256xf32>
    %238 = vector.broadcast %237 : vector<1x1x256xf32> to vector<1x32x256xf32>
    %239 = arith.mulf %24, %238 : vector<1x32x256xf32>
    %c0_124 = arith.constant 0 : index
    %c0_125 = arith.constant 0 : index
    %c0_126 = arith.constant 0 : index
    %240 = vector.load %arg6[%c0_124, %c0_125, %c0_126] : memref<1x32x256xf32, #tpu.memory_space<vmem>>, vector<1x32x256xf32>
    tpu.vector_store %arg6[%c0_124, %c0_125, %c0_126], %239 {strides = array<i32>} : memref<1x32x256xf32, #tpu.memory_space<vmem>>, vector<1x32x256xf32>,
    return
  }
  func.func @transform_0(%arg0: i32) -> (i32, i32, i32) {
    %c0_i32 = arith.constant 0 : i32
    %c0_i32_0 = arith.constant 0 : i32
    %c0_i32_1 = arith.constant 0 : i32
    return %arg0, %c0_i32, %c0_i32_0 : i32, i32, i32
  }
  func.func @transform_1(%arg0: i32) -> (i32, i32) {
    %c0_i32 = arith.constant 0 : i32
    %c0_i32_0 = arith.constant 0 : i32
    %c0_i32_1 = arith.constant 0 : i32
    return %c0_i32, %c0_i32_0 : i32, i32
  }
  func.func @transform_2(%arg0: i32) -> (i32, i32) {
    %c0_i32 = arith.constant 0 : i32
    %c0_i32_0 = arith.constant 0 : i32
    %c0_i32_1 = arith.constant 0 : i32
    return %c0_i32, %c0_i32_0 : i32, i32
  }
  func.func @transform_3(%arg0: i32) -> (i32, i32) {
    %c0_i32 = arith.constant 0 : i32
    %c0_i32_0 = arith.constant 0 : i32
    %c0_i32_1 = arith.constant 0 : i32
    return %c0_i32, %c0_i32_0 : i32, i32
  }
  func.func @transform_4(%arg0: i32) -> (i32, i32) {
    %c0_i32 = arith.constant 0 : i32
    %c0_i32_0 = arith.constant 0 : i32
    %c0_i32_1 = arith.constant 0 : i32
    return %c0_i32, %c0_i32_0 : i32, i32
  }
  func.func @transform_5(%arg0: i32) -> (i32, i32, i32) {
    %c0_i32 = arith.constant 0 : i32
    %c0_i32_0 = arith.constant 0 : i32
    %c0_i32_1 = arith.constant 0 : i32
    return %arg0, %c0_i32, %c0_i32_0 : i32, i32, i32
  }
}

</mosaic_0001>

<llo_original>
// kernel: tpu_custom_call.1
$region0: #{tpu_custom_call.1}
  #allocation0 [shape = 'u32[]', space=smem, size = 0x4, offset = 0x4, fixed_abs, tag = 'smem constant byte address 0x4 - core index']
  #allocation1 [shape = 'u32[72,128]{1,0:T(1,128)}', space=vmem, size = 0x9000, scoped, tag = 'internal scratch']
  %s0 = inlined_call_operand.hbm [shape: f32[2,32,256], index: 0, kind: input, shape index: {}]
  %s1 = inlined_call_operand.vmem [shape: f32[32,2], index: 1, kind: input, shape index: {}]
  %s2 = inlined_call_operand.vmem [shape: f32[2,32], index: 2, kind: input, shape index: {}]
  %s3 = inlined_call_operand.hbm [shape: f32[25,256], index: 3, kind: input, shape index: {}]
  %s4 = inlined_call_operand.hbm [shape: f32[25,256], index: 4, kind: input, shape index: {}]
  %s5 = inlined_call_operand.hbm [shape: f32[2,32,256], index: 5, kind: output, shape index: {}]
  %s6 = sld [smem:[#allocation0]]
  $region65: #{tpu_custom_call.1} parent=0
    _
  %s8 = ssub.s32 1, %s6
  %s9 = scalar_select 0, %s8, %s6
  $region1: #{tpu_custom_call.1} parent=0
    #allocation2 [shape = 'u8[65536]{0}', space=vmem, size = 0x10000, scoped, tag = 'input window, operand 0']
    #allocation3 [shape = 's32[2]{0}', space=sflag, size = 0x8, scoped, tag = 'scoped memory for tpu_custom_call.1']
    #allocation4 [shape = 's32[2]{0}', space=sflag, size = 0x8, scoped, tag = 'scoped memory for tpu_custom_call.1']
    #allocation5 [shape = 'u8[32768]{0}', space=vmem, size = 0x8000, scoped, tag = 'input window, operand 3, single buffered']
    #allocation6 [shape = 's32[1]{0}', space=sflag, size = 0x4, scoped, tag = 'scoped memory for tpu_custom_call.1']
    #allocation7 [shape = 'u8[32768]{0}', space=vmem, size = 0x8000, scoped, tag = 'input window, operand 4, single buffered']
    #allocation8 [shape = 'u8[65536]{0}', space=vmem, size = 0x10000, scoped, tag = 'output window, operand 0']
    %10 = vsyncpa [#allocation3], 0
    %s11 = scalar_lea.sflag [#allocation3], 1
    %12 = vsyncpa %s11, 0
    %13 = vsyncpa [#allocation6], 0
    %14 = vsyncpa [#allocation4], 0
    %s15 = scalar_lea.sflag [#allocation4], 1
    %16 = vsyncpa %s15, 0
    loop: start=0, step=1, limit=4
    $region2: #{tpu_custom_call.1} parent=1 // loop_pre_header
      _
    $region3: #{tpu_custom_call.1} parent=1 // loop_header
      %s18 = sphi 0, %s22
      %p19 = scmp.ge.s32.totalorder %s18, 4
      %s28 = sphi 0, %s30
      %s31 = sphi 0, %s28
      %s32 = sphi 0, %s31
      %s48 = sphi 0, %s32
      %s52 = sphi 0, %s52
      %s54 = sphi 0, %s52
      %s55 = sphi 0, %s54
      %s69 = sphi 0, %s55
      %s73 = sphi 0, %s73
      %s75 = sphi 0, %s73
      %s76 = sphi 0, %s75
      %s90 = sphi 0, %s76
      %s94 = sphi 0, %s94
      %s96 = sphi 0, %s94
      %s97 = sphi 0, %s96
      %s111 = sphi 0, %s97
      %s115 = sphi 0, %s115
      %s117 = sphi 0, %s115
      %s118 = sphi 0, %s117
      %s132 = sphi 0, %s118
      %s138 = sphi 0, %s140
      %s141 = sphi 0, %s138
      %s142 = sphi 0, %s141
      %s158 = sphi 0, %s142
    $region4: #{tpu_custom_call.1} parent=1 // loop_header_branch
      %21 = sbr.rel (%p19) target = $region8
    $region5: #{tpu_custom_call.1} parent=1 // loop_body
      %s23 = ssub.s32 %s18, 1
      %s24 = ssub.s32 %s18, 2
      %s25 = sadd.s32 %s18, 1
      %s26 = ssub.s32 %s18, %s25
      %p27 = scmp.eq.s32.totalorder %s26, 0
      %s29 = sadd.s32 %s28, 1
      %s30 = scalar_select %p27, %s28, %s29
      %p33 = pneg %p27
      %p34 = scmp.eq.s32.totalorder %s18, 1
      %p35 = por %p33, %p34
      %p36 = scmp.ne.s32.totalorder %s28, %s31
      %p37 = scmp.eq.s32.totalorder %s18, 0
      %p38 = por %p36, %p37
      %p39 = scmp.ne.s32.totalorder %s28, %s31
      %p40 = scmp.eq.s32.totalorder %s23, 1
      %p41 = por %p39, %p40
      %p42 = scmp.ne.s32.totalorder %s31, %s32
      %p43 = scmp.eq.s32.totalorder %s23, 0
      %p44 = por %p42, %p43
      %p45 = scmp.ne.s32.totalorder %s31, %s32
      %p46 = scmp.eq.s32.totalorder %s24, 1
      %p47 = por %p45, %p46
      %p49 = scmp.ne.s32.totalorder %s32, %s48
      %p50 = scmp.eq.s32.totalorder %s24, 0
      %p51 = por %p49, %p50
      %s53 = sadd.s32 %s52, 1
      %p56 = scmp.eq.s32.totalorder %s18, 1
      %p57 = scmp.ne.s32.totalorder %s52, %s54
      %p58 = scmp.eq.s32.totalorder %s18, 0
      %p59 = por %p57, %p58
      %p60 = scmp.ne.s32.totalorder %s52, %s54
      %p61 = scmp.eq.s32.totalorder %s23, 1
      %p62 = por %p60, %p61
      %p63 = scmp.ne.s32.totalorder %s54, %s55
      %p64 = scmp.eq.s32.totalorder %s23, 0
      %p65 = por %p63, %p64
      %p66 = scmp.ne.s32.totalorder %s54, %s55
      %p67 = scmp.eq.s32.totalorder %s24, 1
      %p68 = por %p66, %p67
      %p70 = scmp.ne.s32.totalorder %s55, %s69
      %p71 = scmp.eq.s32.totalorder %s24, 0
      %p72 = por %p70, %p71
      %s74 = sadd.s32 %s73, 1
      %p77 = scmp.eq.s32.totalorder %s18, 1
      %p78 = scmp.ne.s32.totalorder %s73, %s75
      %p79 = scmp.eq.s32.totalorder %s18, 0
      %p80 = por %p78, %p79
      %p81 = scmp.ne.s32.totalorder %s73, %s75
      %p82 = scmp.eq.s32.totalorder %s23, 1
      %p83 = por %p81, %p82
      %p84 = scmp.ne.s32.totalorder %s75, %s76
      %p85 = scmp.eq.s32.totalorder %s23, 0
      %p86 = por %p84, %p85
      %p87 = scmp.ne.s32.totalorder %s75, %s76
      %p88 = scmp.eq.s32.totalorder %s24, 1
      %p89 = por %p87, %p88
      %p91 = scmp.ne.s32.totalorder %s76, %s90
      %p92 = scmp.eq.s32.totalorder %s24, 0
      %p93 = por %p91, %p92
      %s95 = sadd.s32 %s94, 1
      %p98 = scmp.eq.s32.totalorder %s18, 1
      %p99 = scmp.ne.s32.totalorder %s94, %s96
      %p100 = scmp.eq.s32.totalorder %s18, 0
      %p101 = por %p99, %p100
      %p102 = scmp.ne.s32.totalorder %s94, %s96
      %p103 = scmp.eq.s32.totalorder %s23, 1
      %p104 = por %p102, %p103
      %p105 = scmp.ne.s32.totalorder %s96, %s97
      %p106 = scmp.eq.s32.totalorder %s23, 0
      %p107 = por %p105, %p106
      %p108 = scmp.ne.s32.totalorder %s96, %s97
      %p109 = scmp.eq.s32.totalorder %s24, 1
      %p110 = por %p108, %p109
      %p112 = scmp.ne.s32.totalorder %s97, %s111
      %p113 = scmp.eq.s32.totalorder %s24, 0
      %p114 = por %p112, %p113
      %s116 = sadd.s32 %s115, 1
      %p119 = scmp.eq.s32.totalorder %s18, 1
      %p120 = scmp.ne.s32.totalorder %s115, %s117
      %p121 = scmp.eq.s32.totalorder %s18, 0
      %p122 = por %p120, %p121
      %p123 = scmp.ne.s32.totalorder %s115, %s117
      %p124 = scmp.eq.s32.totalorder %s23, 1
      %p125 = por %p123, %p124
      %p126 = scmp.ne.s32.totalorder %s117, %s118
      %p127 = scmp.eq.s32.totalorder %s23, 0
      %p128 = por %p126, %p127
      %p129 = scmp.ne.s32.totalorder %s117, %s118
      %p130 = scmp.eq.s32.totalorder %s24, 1
      %p131 = por %p129, %p130
      %p133 = scmp.ne.s32.totalorder %s118, %s132
      %p134 = scmp.eq.s32.totalorder %s24, 0
      %p135 = por %p133, %p134
      %s136 = ssub.s32 %s18, %s25
      %p137 = scmp.eq.s32.totalorder %s136, 0
      %s139 = sadd.s32 %s138, 1
      %s140 = scalar_select %p137, %s138, %s139
      %p143 = pneg %p137
      %p144 = scmp.eq.s32.totalorder %s18, 1
      %p145 = por %p143, %p144
      %p146 = scmp.ne.s32.totalorder %s138, %s141
      %p147 = scmp.eq.s32.totalorder %s18, 0
      %p148 = por %p146, %p147
      %p149 = scmp.ne.s32.totalorder %s138, %s141
      %p150 = scmp.eq.s32.totalorder %s23, 1
      %p151 = por %p149, %p150
      %p152 = scmp.ne.s32.totalorder %s141, %s142
      %p153 = scmp.eq.s32.totalorder %s23, 0
      %p154 = por %p152, %p153
      %p155 = scmp.ne.s32.totalorder %s141, %s142
      %p156 = scmp.eq.s32.totalorder %s24, 1
      %p157 = por %p155, %p156
      %p159 = scmp.ne.s32.totalorder %s142, %s158
      %p160 = scmp.eq.s32.totalorder %s24, 0
      %p161 = por %p159, %p160
      %p162 = scmp.le.s32.totalorder 1, %s18
      %p163 = scmp.lt.s32.totalorder %s18, 3
      %p164 = pnand %p162, %p163
      %p165 = pneg %p164
      // Predicated region
      $region9: #{tpu_custom_call.1} parent=5 // pred_check
        _
      $region10: #{tpu_custom_call.1} parent=5 // pred_check_branch
        %167 = sbr.rel (%p164) target = $region12
      $region11: #{tpu_custom_call.1} parent=5 // pred_region
        %s168 = ssub.s32 %s18, 1
        // Predicated region
        $region13: #{tpu_custom_call.1} parent=11 // pred_check
          %p169 = pneg %p65
        $region14: #{tpu_custom_call.1} parent=11 // pred_check_branch
          %171 = sbr.rel (%p169) target = $region16
        $region15: #{tpu_custom_call.1} parent=11 // pred_region
          _
        $region16: #{tpu_custom_call.1} parent=11 // pred_fallthru
          _
        // Predicated region
        $region17: #{tpu_custom_call.1} parent=11 // pred_check
          %p172 = pneg %p86
        $region18: #{tpu_custom_call.1} parent=11 // pred_check_branch
          %174 = sbr.rel (%p172) target = $region20
        $region19: #{tpu_custom_call.1} parent=11 // pred_region
          _
        $region20: #{tpu_custom_call.1} parent=11 // pred_fallthru
          _
        // Predicated region
        $region21: #{tpu_custom_call.1} parent=11 // pred_check
          %p175 = pneg %p107
        $region22: #{tpu_custom_call.1} parent=11 // pred_check_branch
          %177 = sbr.rel (%p175) target = $region24
        $region23: #{tpu_custom_call.1} parent=11 // pred_region
          %179 = vsyncadd [#allocation6], 0
          %s180 = sshll.u32 %s3, 4
          %s181 = int_to_ptr.hbm [resolvable:$true] %s180
          %s182 = sshll.u32 [#allocation5], 4
          %s183 = int_to_ptr.vmem [resolvable:$true] %s182
          %188 = dma.hbm_to_vmem [thread:$0]  %s181, 1024, %s183, [#allocation6], 256, 256, 16
        $region24: #{tpu_custom_call.1} parent=11 // pred_fallthru
          _
        // Predicated region
        $region25: #{tpu_custom_call.1} parent=11 // pred_check
          %p189 = pneg %p128
        $region26: #{tpu_custom_call.1} parent=11 // pred_check_branch
          %191 = sbr.rel (%p189) target = $region28
        $region27: #{tpu_custom_call.1} parent=11 // pred_region
          %193 = vsyncadd [#allocation6], 0
          %s194 = sshll.u32 %s4, 4
          %s195 = int_to_ptr.hbm [resolvable:$true] %s194
          %s196 = sshll.u32 [#allocation7], 4
          %s197 = int_to_ptr.vmem [resolvable:$true] %s196
          %202 = dma.hbm_to_vmem [thread:$0]  %s195, 1024, %s197, [#allocation6], 256, 256, 16
        $region28: #{tpu_custom_call.1} parent=11 // pred_fallthru
          _
      $region12: #{tpu_custom_call.1} parent=5 // pred_fallthru
        _
      %p203 = scmp.lt.s32.totalorder %s18, 2
      // Predicated region
      $region29: #{tpu_custom_call.1} parent=5 // pred_check
        %p204 = pneg %p203
      $region30: #{tpu_custom_call.1} parent=5 // pred_check_branch
        %206 = sbr.rel (%p204) target = $region32
      $region31: #{tpu_custom_call.1} parent=5 // pred_region
        // Predicated region
        $region33: #{tpu_custom_call.1} parent=31 // pred_check
          %p207 = pneg %p38
        $region34: #{tpu_custom_call.1} parent=31 // pred_check_branch
          %209 = sbr.rel (%p207) target = $region36
        $region35: #{tpu_custom_call.1} parent=31 // pred_region
          %s210 = sand.u32 %s28, 1
          %s211 = scalar_lea.sflag [#allocation3], %s210
          %s212 = sand.u32 %s28, 1
          %s213 = smul.addr %s212, 64
          %s214 = scalar_lea.vmem [#allocation2], %s213
          %216 = vsyncadd %s211, 0
          %s217 = smul.addr %s18, 8
          %s218 = smul.addr %s217, 8
          %s219 = scalar_lea.hbm %s0, %s218
          %s220 = sshll.u32 %s219, 4
          %s221 = int_to_ptr.hbm [resolvable:$true] %s220
          %s222 = sshll.u32 %s214, 4
          %s223 = int_to_ptr.vmem [resolvable:$true] %s222
          %228 = dma.hbm_to_vmem [thread:$0]  %s221, 1024, %s223, %s211, 256, 256, 16
        $region36: #{tpu_custom_call.1} parent=31 // pred_fallthru
          _
      $region32: #{tpu_custom_call.1} parent=5 // pred_fallthru
        _
      %p229 = scmp.le.s32.totalorder 1, %s18
      %p230 = scmp.lt.s32.totalorder %s18, 3
      %p231 = pnand %p229, %p230
      %p232 = pneg %p231
      // Predicated region
      $region37: #{tpu_custom_call.1} parent=5 // pred_check
        _
      $region38: #{tpu_custom_call.1} parent=5 // pred_check_branch
        %234 = sbr.rel (%p231) target = $region40
      $region39: #{tpu_custom_call.1} parent=5 // pred_region
        %s235 = ssub.s32 %s18, 1
        %s236 = sand.u32 %s31, 1
        %s237 = scalar_lea.sflag [#allocation3], %s236
        %s238 = sand.u32 %s31, 1
        %s239 = smul.addr %s238, 64
        %s240 = scalar_lea.vmem [#allocation2], %s239
        // Predicated region
        $region41: #{tpu_custom_call.1} parent=39 // pred_check
          %p241 = pneg %p44
        $region42: #{tpu_custom_call.1} parent=39 // pred_check_branch
          %243 = sbr.rel (%p241) target = $region44
        $region43: #{tpu_custom_call.1} parent=39 // pred_region
          %245 = dma.done %s237, 1024
        $region44: #{tpu_custom_call.1} parent=39 // pred_fallthru
          _
        // Predicated region
        $region45: #{tpu_custom_call.1} parent=39 // pred_check
          %p246 = pneg %p107
        $region46: #{tpu_custom_call.1} parent=39 // pred_check_branch
          %248 = sbr.rel (%p246) target = $region48
        $region47: #{tpu_custom_call.1} parent=39 // pred_region
          %250 = dma.done [#allocation6], 1024
        $region48: #{tpu_custom_call.1} parent=39 // pred_fallthru
          _
        // Predicated region
        $region49: #{tpu_custom_call.1} parent=39 // pred_check
          %p251 = pneg %p128
        $region50: #{tpu_custom_call.1} parent=39 // pred_check_branch
          %253 = sbr.rel (%p251) target = $region52
        $region51: #{tpu_custom_call.1} parent=39 // pred_region
          %255 = dma.done [#allocation6], 1024
        $region52: #{tpu_custom_call.1} parent=39 // pred_fallthru
          _
        %s256 = sand.u32 %s31, 1
        %s257 = scalar_lea.sflag [#allocation3], %s256
        %s258 = sand.u32 %s31, 1
        %s259 = smul.addr %s258, 64
        %s260 = scalar_lea.vmem [#allocation2], %s259
        %p261 = pneg %p44
        %p262 = pneg %p41
        %p263 = pneg %p65
        %p264 = pneg %p62
        %p265 = pneg %p86
        %p266 = pneg %p83
        %p267 = pneg %p107
        %p268 = pneg %p104
        %p269 = pneg %p128
        %p270 = pneg %p125
        %p271 = pneg %p154
        %p272 = pneg %p151
        %s273 = sand.u32 %s141, 1
        %s274 = scalar_lea.sflag [#allocation4], %s273
        %s275 = sand.u32 %s141, 1
        %s276 = smul.addr %s275, 64
        %s277 = scalar_lea.vmem [#allocation8], %s276
        %v278 = vld [vmem:[%s240] sm:$0xff]
        %v279 = vld [vmem:[%s240 + $0x8] sm:$0xff]
        %v280 = vld [vmem:[%s240 + $0x10] sm:$0xff]
        %v281 = vld [vmem:[%s240 + $0x18] sm:$0xff]
        %v282 = vld [vmem:[%s240 + $0x20] sm:$0xff]
        %v283 = vld [vmem:[%s240 + $0x28] sm:$0xff]
        %v284 = vld [vmem:[%s240 + $0x30] sm:$0xff]
        %v285 = vld [vmem:[%s240 + $0x38] sm:$0xff]
        %v286 = vadd.f32 %v278, %v279
        %287 = vadd.xlane.f32.xlu0 %v286
        %v288 = vpop.xlane.xlu0 %287
        %v289 = vadd.f32 %v280, %v281
        %290 = vadd.xlane.f32.xlu0 %v289
        %v291 = vpop.xlane.xlu0 %290
        %v292 = vadd.f32 %v282, %v283
        %293 = vadd.xlane.f32.xlu0 %v292
        %v294 = vpop.xlane.xlu0 %293
        %v295 = vadd.f32 %v284, %v285
        %296 = vadd.xlane.f32.xlu0 %v295
        %v297 = vpop.xlane.xlu0 %296
        %v298 = vmul.f32 %v288, 0.00390625
        %v299 = vmul.f32 %v291, 0.00390625
        %v300 = vmul.f32 %v294, 0.00390625
        %v301 = vmul.f32 %v297, 0.00390625
        %v302 = vmax.f32 %v278, %v279
        %303 = vmax.xlane.f32.xlu0 %v302
        %v304 = vpop.xlane.xlu0 %303
        %v305 = vmax.f32 %v280, %v281
        %306 = vmax.xlane.f32.xlu0 %v305
        %v307 = vpop.xlane.xlu0 %306
        %v308 = vmax.f32 %v282, %v283
        %309 = vmax.xlane.f32.xlu0 %v308
        %v310 = vpop.xlane.xlu0 %309
        %v311 = vmax.f32 %v284, %v285
        %312 = vmax.xlane.f32.xlu0 %v311
        %v313 = vpop.xlane.xlu0 %312
        %v314 = vld [vmem:[%s1] sm:$0xff]
        %v315 = vld [vmem:[%s1 + $0x8] sm:$0xff]
        %v316 = vld [vmem:[%s1 + $0x10] sm:$0xff]
        %v317 = vld [vmem:[%s1 + $0x18] sm:$0xff]
        %v318 = vld [vmem:[%s2] sm:$0x3]
        %v323 = vlaneseq
        %v324 = vand.u32 %v323, 127
        %v325 = vperm.slane %v298, %v324
        %v326 = vadd.s32 %v324, 4294967288
        %v327 = vperm.slane %v299, %v326
        %vm328 = vcmask 130112
        %v329 = vsel %vm328, %v327, %v325
        %v330 = vadd.s32 %v324, 4294967280
        %v331 = vperm.slane %v300, %v330
        %vm332 = vcmask 195712
        %v333 = vsel %vm332, %v331, %v329
        %v334 = vadd.s32 %v324, 4294967272
        %v335 = vperm.slane %v301, %v334
        %vm336 = vcmask 261312
        %v337 = vsel %vm336, %v335, %v333
        %vm338 = vcmask 261120
        %v339 = vsel %vm338, %v337, 0
        %341 = vmatpush.msra.mxu0 0.0
        %342 = vmatpush.msra.mxu0 0.0
        %343 = vmatpush.msra.mxu0 0.0
        %344 = vmatpush.msra.mxu0 0.0
        %345 = vmatpush.msra.mxu0 0.0
        %346 = vmatpush.msra.mxu0 0.0
        %347 = vmatpush.msra.mxu0 0.0
        %348 = vmatpush.msra.mxu0 0.0
        %349 = vmatpush.msra.mxu0 0.0
        %350 = vmatpush.msra.mxu0 0.0
        %351 = vmatpush.msra.mxu0 0.0
        %352 = vmatpush.msra.mxu0 0.0
        %353 = vmatpush.msra.mxu0 %v317
        %354 = vmatpush.msra.mxu0 %v316
        %355 = vmatpush.msra.mxu0 %v315
        %356 = vmatpush.msra.mxu0 %v314
        %357 = vmatmul.f32.gmra.mxu0 %v339
        %v358 = vpop.f32.mrf.mxu0
        %v359 = vadd.f32 0.0, %v358
        %360 = vdwg.mxu0
        %v361 = vmax.f32 %v359, 0.0
        %v366 = vperm.slane %v304, %v324
        %v367 = vperm.slane %v307, %v326
        %v368 = vsel %vm328, %v367, %v366
        %v369 = vperm.slane %v310, %v330
        %v370 = vsel %vm332, %v369, %v368
        %v371 = vperm.slane %v313, %v334
        %v372 = vsel %vm336, %v371, %v370
        %v373 = vsel %vm338, %v372, 0
        %375 = vmatpush.msra.mxu0 0.0
        %376 = vmatpush.msra.mxu0 0.0
        %377 = vmatpush.msra.mxu0 0.0
        %378 = vmatpush.msra.mxu0 0.0
        %379 = vmatpush.msra.mxu0 0.0
        %380 = vmatpush.msra.mxu0 0.0
        %381 = vmatpush.msra.mxu0 0.0
        %382 = vmatpush.msra.mxu0 0.0
        %383 = vmatpush.msra.mxu0 0.0
        %384 = vmatpush.msra.mxu0 0.0
        %385 = vmatpush.msra.mxu0 0.0
        %386 = vmatpush.msra.mxu0 0.0
        %387 = vmatpush.msra.mxu0 %v317
        %388 = vmatpush.msra.mxu0 %v316
        %389 = vmatpush.msra.mxu0 %v315
        %390 = vmatpush.msra.mxu0 %v314
        %391 = vmatmul.f32.gmra.mxu0 %v373
        %v392 = vpop.f32.mrf.mxu0
        %v393 = vadd.f32 0.0, %v392
        %394 = vdwg.mxu0
        %v395 = vmax.f32 %v393, 0.0
        %v396 = vadd.f32 %v361, %v395
        %vm397 = vcmask 15360
        %v399 = vsel %vm397, %v396, 0
        %vm401 = vcmask 1041408
        %v403 = vsel %vm401, %v318, 0
        %405 = vmatpush.msra.mxu0 0.0
        %406 = vmatpush.msra.mxu0 0.0
        %407 = vmatpush.msra.mxu0 0.0
        %408 = vmatpush.msra.mxu0 0.0
        %409 = vmatpush.msra.mxu0 0.0
        %410 = vmatpush.msra.mxu0 0.0
        %411 = vmatpush.msra.mxu0 0.0
        %412 = vmatpush.msra.mxu0 0.0
        %413 = vmatpush.msra.mxu0 0.0
        %414 = vmatpush.msra.mxu0 0.0
        %415 = vmatpush.msra.mxu0 0.0
        %416 = vmatpush.msra.mxu0 0.0
        %417 = vmatpush.msra.mxu0 0.0
        %418 = vmatpush.msra.mxu0 0.0
        %419 = vmatpush.msra.mxu0 0.0
        %420 = vmatpush.msra.mxu0 %v403
        %421 = vmatmul.f32.gmra.mxu0 %v399
        %v422 = vpop.f32.mrf.mxu0
        %v423 = vadd.f32 0.0, %v422
        %424 = vdwg.mxu0
        %v425 = vsub.f32 0.0, %v423
        %v426 = vmul.f32 %v425, 1.442695
        %v427 = vpow.pop %v426
        %v428 = vadd.f32 %v427, 1.0
        %v429 = vrcp.pop %v428
        %v430 = vmul.f32 %v428, %v429
        %v431 = vsub.f32 1.0, %v430
        %v432 = vmul.f32 %v429, %v431
        %v433 = vadd.f32 %v429, %v432
        %vm434 = vweird.f32 %v428
        %vm435 = vweird.f32 %v429
        %vm436 = vmor %vm434, %vm435
        %v437 = vsel %vm436, %v429, %v433
        %v438 = vand.u32 2147483647, %v428
        %vm439 = vcmp.eq.f32.partialorder %v438, 8.507059e+37
        %v440 = vand.u32 %v428, 2147483648
        %v441 = vor.u32 1.1754944e-38, %v440
        %v442 = vsel %vm439, %v441, %v437
        %v443 = vmul.f32 1.0, %v442
        %v444 = vperm.slane %v443, 0
        %v445 = vlaneseq
        %v446 = vshrl.u32 %v445, 7
        %448 = vset.pattern.permute.xlu0 %v446
        %449 = vperm.xlu0 %448, %v444
        %v450 = vpop.permute.xlu0 %449
        %v451 = vlaneseq
        %v452 = vshrl.u32 %v451, 7
        %v453 = vadd.s32 %v452, 8
        %454 = vset.pattern.permute.xlu0 %v453
        %455 = vperm.xlu0 %454, %v444
        %v456 = vpop.permute.xlu0 %455
        %v457 = vlaneseq
        %v458 = vshrl.u32 %v457, 7
        %v459 = vadd.s32 %v458, 16
        %460 = vset.pattern.permute.xlu0 %v459
        %461 = vperm.xlu0 %460, %v444
        %v462 = vpop.permute.xlu0 %461
        %v463 = vlaneseq
        %v464 = vshrl.u32 %v463, 7
        %v465 = vadd.s32 %v464, 24
        %466 = vset.pattern.permute.xlu0 %v465
        %467 = vperm.xlu0 %466, %v444
        %v468 = vpop.permute.xlu0 %467
        %v469 = vmul.f32 %v278, %v450
        %v470 = vmul.f32 %v279, %v450
        %v471 = vmul.f32 %v280, %v456
        %v472 = vmul.f32 %v281, %v456
        %v473 = vmul.f32 %v282, %v462
        %v474 = vmul.f32 %v283, %v462
        %v475 = vmul.f32 %v284, %v468
        %v476 = vmul.f32 %v285, %v468
        %v477 = vadd.f32 %v469, %v471
        %v478 = vadd.f32 %v477, %v473
        %v479 = vadd.f32 %v478, %v475
        %v480 = vrot.slane %v479, 4
        %v481 = vadd.f32 %v479, %v480
        %v482 = vrot.slane %v481, 2
        %v483 = vadd.f32 %v481, %v482
        %v484 = vrot.slane %v483, 1
        %v485 = vadd.f32 %v483, %v484
        %v486 = vadd.f32 %v470, %v472
        %v487 = vadd.f32 %v486, %v474
        %v488 = vadd.f32 %v487, %v476
        %v489 = vrot.slane %v488, 4
        %v490 = vadd.f32 %v488, %v489
        %v491 = vrot.slane %v490, 2
        %v492 = vadd.f32 %v490, %v491
        %v493 = vrot.slane %v492, 1
        %v494 = vadd.f32 %v492, %v493
        %v495 = vmul.f32 %v485, 0.03125
        %v496 = vmul.f32 %v494, 0.03125
        %v497 = vmax.f32 %v469, %v473
        %v498 = vmax.f32 %v471, %v475
        %v499 = vmax.f32 %v497, %v498
        %v500 = vrot.slane %v499, 4
        %v501 = vmax.f32 %v499, %v500
        %v502 = vrot.slane %v501, 2
        %v503 = vmax.f32 %v501, %v502
        %v504 = vrot.slane %v503, 1
        %v505 = vmax.f32 %v503, %v504
        %v506 = vmax.f32 %v470, %v474
        %v507 = vmax.f32 %v472, %v476
        %v508 = vmax.f32 %v506, %v507
        %v509 = vrot.slane %v508, 4
        %v510 = vmax.f32 %v508, %v509
        %v511 = vrot.slane %v510, 2
        %v512 = vmax.f32 %v510, %v511
        %v513 = vrot.slane %v512, 1
        %v514 = vmax.f32 %v512, %v513
        %515 = vrot.lane.b32.xlu0 %v495, 34
        %v516 = vpop.permute.xlu0 %515
        %517 = vrot.lane.b32.xlu0 %v496, 34
        %v518 = vpop.permute.xlu0 %517
        %vm519 = vcmp.lt.s32.totalorder %v324, 34
        %v520 = vsel %vm519, %v516, %v518
        %v521 = vsel %vm519, %v518, %v516
        %522 = vrot.lane.b32.xlu0 %v505, 34
        %v523 = vpop.permute.xlu0 %522
        %524 = vrot.lane.b32.xlu0 %v514, 34
        %v525 = vpop.permute.xlu0 %524
        %v526 = vsel %vm519, %v523, %v525
        %v527 = vsel %vm519, %v525, %v523
        %v528 = vld [vmem:[#allocation5] ss:$8 sm:$0x3]
        %v530 = vperm.slane %v528, 0
        %v531 = vperm.slane %v528, 1
        %v534 = vmul.f32 %v521, %v530
        %v535 = vmul.f32 %v520, %v531
        %v536 = vld [vmem:[#allocation7] ss:$8 sm:$0x3]
        %v538 = vperm.slane %v536, 0
        %v539 = vperm.slane %v536, 1
        %v542 = vmul.f32 %v527, %v538
        %v543 = vmul.f32 %v526, %v539
        %v544 = vadd.f32 %v534, %v542
        %v545 = vadd.f32 %v535, %v543
        %v546 = vadd.f32 %v544, 0.0
        %v547 = vadd.f32 %v545, 0.0
        %548 = vrot.lane.b32.xlu0 %v495, 33
        %v549 = vpop.permute.xlu0 %548
        %550 = vrot.lane.b32.xlu0 %v496, 33
        %v551 = vpop.permute.xlu0 %550
        %vm552 = vcmp.lt.s32.totalorder %v324, 33
        %v553 = vsel %vm552, %v549, %v551
        %v554 = vsel %vm552, %v551, %v549
        %555 = vrot.lane.b32.xlu0 %v505, 33
        %v556 = vpop.permute.xlu0 %555
        %557 = vrot.lane.b32.xlu0 %v514, 33
        %v558 = vpop.permute.xlu0 %557
        %v559 = vsel %vm552, %v556, %v558
        %v560 = vsel %vm552, %v558, %v556
        %s561 = scalar_lea.vmem [#allocation5], 1
        %v562 = vld [vmem:[%s561] ss:$8 sm:$0x3]
        %v564 = vperm.slane %v562, 0
        %v565 = vperm.slane %v562, 1
        %v568 = vmul.f32 %v554, %v564
        %v569 = vmul.f32 %v553, %v565
        %s570 = scalar_lea.vmem [#allocation7], 1
        %v571 = vld [vmem:[%s570] ss:$8 sm:$0x3]
        %v573 = vperm.slane %v571, 0
        %v574 = vperm.slane %v571, 1
        %v577 = vmul.f32 %v560, %v573
        %v578 = vmul.f32 %v559, %v574
        %v579 = vadd.f32 %v568, %v577
        %v580 = vadd.f32 %v569, %v578
        %v581 = vadd.f32 %v579, 0.0
        %v582 = vadd.f32 %v580, 0.0
        %583 = vrot.lane.b32.xlu0 %v495, 32
        %v584 = vpop.permute.xlu0 %583
        %585 = vrot.lane.b32.xlu0 %v496, 32
        %v586 = vpop.permute.xlu0 %585
        %vm587 = vcmp.lt.s32.totalorder %v324, 32
        %v588 = vsel %vm587, %v584, %v586
        %v589 = vsel %vm587, %v586, %v584
        %590 = vrot.lane.b32.xlu0 %v505, 32
        %v591 = vpop.permute.xlu0 %590
        %592 = vrot.lane.b32.xlu0 %v514, 32
        %v593 = vpop.permute.xlu0 %592
        %v594 = vsel %vm587, %v591, %v593
        %v595 = vsel %vm587, %v593, %v591
        %s596 = scalar_lea.vmem [#allocation5], 2
        %v597 = vld [vmem:[%s596] ss:$8 sm:$0x3]
        %v599 = vperm.slane %v597, 0
        %v600 = vperm.slane %v597, 1
        %v603 = vmul.f32 %v589, %v599
        %v604 = vmul.f32 %v588, %v600
        %s605 = scalar_lea.vmem [#allocation7], 2
        %v606 = vld [vmem:[%s605] ss:$8 sm:$0x3]
        %v608 = vperm.slane %v606, 0
        %v609 = vperm.slane %v606, 1
        %v612 = vmul.f32 %v595, %v608
        %v613 = vmul.f32 %v594, %v609
        %v614 = vadd.f32 %v603, %v612
        %v615 = vadd.f32 %v604, %v613
        %v616 = vadd.f32 %v546, %v614
        %v617 = vadd.f32 %v547, %v615
        %618 = vrot.lane.b32.xlu0 %v495, 31
        %v619 = vpop.permute.xlu0 %618
        %620 = vrot.lane.b32.xlu0 %v496, 31
        %v621 = vpop.permute.xlu0 %620
        %vm622 = vcmp.lt.s32.totalorder %v324, 31
        %v623 = vsel %vm622, %v619, %v621
        %v624 = vsel %vm622, %v621, %v619
        %625 = vrot.lane.b32.xlu0 %v505, 31
        %v626 = vpop.permute.xlu0 %625
        %627 = vrot.lane.b32.xlu0 %v514, 31
        %v628 = vpop.permute.xlu0 %627
        %v629 = vsel %vm622, %v626, %v628
        %v630 = vsel %vm622, %v628, %v626
        %s631 = scalar_lea.vmem [#allocation5], 3
        %v632 = vld [vmem:[%s631] ss:$8 sm:$0x3]
        %v634 = vperm.slane %v632, 0
        %v635 = vperm.slane %v632, 1
        %v638 = vmul.f32 %v624, %v634
        %v639 = vmul.f32 %v623, %v635
        %s640 = scalar_lea.vmem [#allocation7], 3
        %v641 = vld [vmem:[%s640] ss:$8 sm:$0x3]
        %v643 = vperm.slane %v641, 0
        %v644 = vperm.slane %v641, 1
        %v647 = vmul.f32 %v630, %v643
        %v648 = vmul.f32 %v629, %v644
        %v649 = vadd.f32 %v638, %v647
        %v650 = vadd.f32 %v639, %v648
        %v651 = vadd.f32 %v581, %v649
        %v652 = vadd.f32 %v582, %v650
        %653 = vrot.lane.b32.xlu0 %v495, 30
        %v654 = vpop.permute.xlu0 %653
        %655 = vrot.lane.b32.xlu0 %v496, 30
        %v656 = vpop.permute.xlu0 %655
        %vm657 = vcmp.lt.s32.totalorder %v324, 30
        %v658 = vsel %vm657, %v654, %v656
        %v659 = vsel %vm657, %v656, %v654
        %660 = vrot.lane.b32.xlu0 %v505, 30
        %v661 = vpop.permute.xlu0 %660
        %662 = vrot.lane.b32.xlu0 %v514, 30
        %v663 = vpop.permute.xlu0 %662
        %v664 = vsel %vm657, %v661, %v663
        %v665 = vsel %vm657, %v663, %v661
        %s666 = scalar_lea.vmem [#allocation5], 4
        %v667 = vld [vmem:[%s666] ss:$8 sm:$0x3]
        %v669 = vperm.slane %v667, 0
        %v670 = vperm.slane %v667, 1
        %v673 = vmul.f32 %v659, %v669
        %v674 = vmul.f32 %v658, %v670
        %s675 = scalar_lea.vmem [#allocation7], 4
        %v676 = vld [vmem:[%s675] ss:$8 sm:$0x3]
        %v678 = vperm.slane %v676, 0
        %v679 = vperm.slane %v676, 1
        %v682 = vmul.f32 %v665, %v678
        %v683 = vmul.f32 %v664, %v679
        %v684 = vadd.f32 %v673, %v682
        %v685 = vadd.f32 %v674, %v683
        %v686 = vadd.f32 %v616, %v684
        %v687 = vadd.f32 %v617, %v685
        %688 = vrot.lane.b32.xlu0 %v495, 18
        %v689 = vpop.permute.xlu0 %688
        %690 = vrot.lane.b32.xlu0 %v496, 18
        %v691 = vpop.permute.xlu0 %690
        %vm692 = vcmp.lt.s32.totalorder %v324, 18
        %v693 = vsel %vm692, %v689, %v691
        %v694 = vsel %vm692, %v691, %v689
        %695 = vrot.lane.b32.xlu0 %v505, 18
        %v696 = vpop.permute.xlu0 %695
        %697 = vrot.lane.b32.xlu0 %v514, 18
        %v698 = vpop.permute.xlu0 %697
        %v699 = vsel %vm692, %v696, %v698
        %v700 = vsel %vm692, %v698, %v696
        %s701 = scalar_lea.vmem [#allocation5], 5
        %v702 = vld [vmem:[%s701] ss:$8 sm:$0x3]
        %v704 = vperm.slane %v702, 0
        %v705 = vperm.slane %v702, 1
        %v708 = vmul.f32 %v694, %v704
        %v709 = vmul.f32 %v693, %v705
        %s710 = scalar_lea.vmem [#allocation7], 5
        %v711 = vld [vmem:[%s710] ss:$8 sm:$0x3]
        %v713 = vperm.slane %v711, 0
        %v714 = vperm.slane %v711, 1
        %v717 = vmul.f32 %v700, %v713
        %v718 = vmul.f32 %v699, %v714
        %v719 = vadd.f32 %v708, %v717
        %v720 = vadd.f32 %v709, %v718
        %v721 = vadd.f32 %v651, %v719
        %v722 = vadd.f32 %v652, %v720
        %723 = vrot.lane.b32.xlu0 %v495, 17
        %v724 = vpop.permute.xlu0 %723
        %725 = vrot.lane.b32.xlu0 %v496, 17
        %v726 = vpop.permute.xlu0 %725
        %vm727 = vcmp.lt.s32.totalorder %v324, 17
        %v728 = vsel %vm727, %v724, %v726
        %v729 = vsel %vm727, %v726, %v724
        %730 = vrot.lane.b32.xlu0 %v505, 17
        %v731 = vpop.permute.xlu0 %730
        %732 = vrot.lane.b32.xlu0 %v514, 17
        %v733 = vpop.permute.xlu0 %732
        %v734 = vsel %vm727, %v731, %v733
        %v735 = vsel %vm727, %v733, %v731
        %s736 = scalar_lea.vmem [#allocation5], 6
        %v737 = vld [vmem:[%s736] ss:$8 sm:$0x3]
        %v739 = vperm.slane %v737, 0
        %v740 = vperm.slane %v737, 1
        %v743 = vmul.f32 %v729, %v739
        %v744 = vmul.f32 %v728, %v740
        %s745 = scalar_lea.vmem [#allocation7], 6
        %v746 = vld [vmem:[%s745] ss:$8 sm:$0x3]
        %v748 = vperm.slane %v746, 0
        %v749 = vperm.slane %v746, 1
        %v752 = vmul.f32 %v735, %v748
        %v753 = vmul.f32 %v734, %v749
        %v754 = vadd.f32 %v743, %v752
        %v755 = vadd.f32 %v744, %v753
        %v756 = vadd.f32 %v686, %v754
        %v757 = vadd.f32 %v687, %v755
        %758 = vrot.lane.b32.xlu0 %v495, 16
        %v759 = vpop.permute.xlu0 %758
        %760 = vrot.lane.b32.xlu0 %v496, 16
        %v761 = vpop.permute.xlu0 %760
        %vm762 = vcmp.lt.s32.totalorder %v324, 16
        %v763 = vsel %vm762, %v759, %v761
        %v764 = vsel %vm762, %v761, %v759
        %765 = vrot.lane.b32.xlu0 %v505, 16
        %v766 = vpop.permute.xlu0 %765
        %767 = vrot.lane.b32.xlu0 %v514, 16
        %v768 = vpop.permute.xlu0 %767
        %v769 = vsel %vm762, %v766, %v768
        %v770 = vsel %vm762, %v768, %v766
        %s771 = scalar_lea.vmem [#allocation5], 7
        %v772 = vld [vmem:[%s771] ss:$8 sm:$0x3]
        %v774 = vperm.slane %v772, 0
        %v775 = vperm.slane %v772, 1
        %v778 = vmul.f32 %v764, %v774
        %v779 = vmul.f32 %v763, %v775
        %s780 = scalar_lea.vmem [#allocation7], 7
        %v781 = vld [vmem:[%s780] ss:$8 sm:$0x3]
        %v783 = vperm.slane %v781, 0
        %v784 = vperm.slane %v781, 1
        %v787 = vmul.f32 %v770, %v783
        %v788 = vmul.f32 %v769, %v784
        %v789 = vadd.f32 %v778, %v787
        %v790 = vadd.f32 %v779, %v788
        %v791 = vadd.f32 %v721, %v789
        %v792 = vadd.f32 %v722, %v790
        %793 = vrot.lane.b32.xlu0 %v495, 15
        %v794 = vpop.permute.xlu0 %793
        %795 = vrot.lane.b32.xlu0 %v496, 15
        %v796 = vpop.permute.xlu0 %795
        %vm797 = vcmp.lt.s32.totalorder %v324, 15
        %v798 = vsel %vm797, %v794, %v796
        %v799 = vsel %vm797, %v796, %v794
        %800 = vrot.lane.b32.xlu0 %v505, 15
        %v801 = vpop.permute.xlu0 %800
        %802 = vrot.lane.b32.xlu0 %v514, 15
        %v803 = vpop.permute.xlu0 %802
        %v804 = vsel %vm797, %v801, %v803
        %v805 = vsel %vm797, %v803, %v801
        %s806 = scalar_lea.vmem [#allocation5], 16
        %v807 = vld [vmem:[%s806] ss:$8 sm:$0x3]
        %v809 = vperm.slane %v807, 0
        %v810 = vperm.slane %v807, 1
        %v813 = vmul.f32 %v799, %v809
        %v814 = vmul.f32 %v798, %v810
        %s815 = scalar_lea.vmem [#allocation7], 16
        %v816 = vld [vmem:[%s815] ss:$8 sm:$0x3]
        %v818 = vperm.slane %v816, 0
        %v819 = vperm.slane %v816, 1
        %v822 = vmul.f32 %v805, %v818
        %v823 = vmul.f32 %v804, %v819
        %v824 = vadd.f32 %v813, %v822
        %v825 = vadd.f32 %v814, %v823
        %v826 = vadd.f32 %v756, %v824
        %v827 = vadd.f32 %v757, %v825
        %828 = vrot.lane.b32.xlu0 %v495, 14
        %v829 = vpop.permute.xlu0 %828
        %830 = vrot.lane.b32.xlu0 %v496, 14
        %v831 = vpop.permute.xlu0 %830
        %vm832 = vcmp.lt.s32.totalorder %v324, 14
        %v833 = vsel %vm832, %v829, %v831
        %v834 = vsel %vm832, %v831, %v829
        %835 = vrot.lane.b32.xlu0 %v505, 14
        %v836 = vpop.permute.xlu0 %835
        %837 = vrot.lane.b32.xlu0 %v514, 14
        %v838 = vpop.permute.xlu0 %837
        %v839 = vsel %vm832, %v836, %v838
        %v840 = vsel %vm832, %v838, %v836
        %s841 = scalar_lea.vmem [#allocation5], 17
        %v842 = vld [vmem:[%s841] ss:$8 sm:$0x3]
        %v844 = vperm.slane %v842, 0
        %v845 = vperm.slane %v842, 1
        %v848 = vmul.f32 %v834, %v844
        %v849 = vmul.f32 %v833, %v845
        %s850 = scalar_lea.vmem [#allocation7], 17
        %v851 = vld [vmem:[%s850] ss:$8 sm:$0x3]
        %v853 = vperm.slane %v851, 0
        %v854 = vperm.slane %v851, 1
        %v857 = vmul.f32 %v840, %v853
        %v858 = vmul.f32 %v839, %v854
        %v859 = vadd.f32 %v848, %v857
        %v860 = vadd.f32 %v849, %v858
        %v861 = vadd.f32 %v791, %v859
        %v862 = vadd.f32 %v792, %v860
        %863 = vrot.lane.b32.xlu0 %v495, 2
        %v864 = vpop.permute.xlu0 %863
        %865 = vrot.lane.b32.xlu0 %v496, 2
        %v866 = vpop.permute.xlu0 %865
        %vm867 = vcmp.lt.s32.totalorder %v324, 2
        %v868 = vsel %vm867, %v864, %v866
        %v869 = vsel %vm867, %v866, %v864
        %870 = vrot.lane.b32.xlu0 %v505, 2
        %v871 = vpop.permute.xlu0 %870
        %872 = vrot.lane.b32.xlu0 %v514, 2
        %v873 = vpop.permute.xlu0 %872
        %v874 = vsel %vm867, %v871, %v873
        %v875 = vsel %vm867, %v873, %v871
        %s876 = scalar_lea.vmem [#allocation5], 18
        %v877 = vld [vmem:[%s876] ss:$8 sm:$0x3]
        %v879 = vperm.slane %v877, 0
        %v880 = vperm.slane %v877, 1
        %v883 = vmul.f32 %v869, %v879
        %v884 = vmul.f32 %v868, %v880
        %s885 = scalar_lea.vmem [#allocation7], 18
        %v886 = vld [vmem:[%s885] ss:$8 sm:$0x3]
        %v888 = vperm.slane %v886, 0
        %v889 = vperm.slane %v886, 1
        %v892 = vmul.f32 %v875, %v888
        %v893 = vmul.f32 %v874, %v889
        %v894 = vadd.f32 %v883, %v892
        %v895 = vadd.f32 %v884, %v893
        %v896 = vadd.f32 %v826, %v894
        %v897 = vadd.f32 %v827, %v895
        %898 = vrot.lane.b32.xlu0 %v495, 1
        %v899 = vpop.permute.xlu0 %898
        %900 = vrot.lane.b32.xlu0 %v496, 1
        %v901 = vpop.permute.xlu0 %900
        %vm902 = vcmp.lt.s32.totalorder %v324, 1
        %v903 = vsel %vm902, %v899, %v901
        %v904 = vsel %vm902, %v901, %v899
        %905 = vrot.lane.b32.xlu0 %v505, 1
        %v906 = vpop.permute.xlu0 %905
        %907 = vrot.lane.b32.xlu0 %v514, 1
        %v908 = vpop.permute.xlu0 %907
        %v909 = vsel %vm902, %v906, %v908
        %v910 = vsel %vm902, %v908, %v906
        %s911 = scalar_lea.vmem [#allocation5], 19
        %v912 = vld [vmem:[%s911] ss:$8 sm:$0x3]
        %v914 = vperm.slane %v912, 0
        %v915 = vperm.slane %v912, 1
        %v918 = vmul.f32 %v904, %v914
        %v919 = vmul.f32 %v903, %v915
        %s920 = scalar_lea.vmem [#allocation7], 19
        %v921 = vld [vmem:[%s920] ss:$8 sm:$0x3]
        %v923 = vperm.slane %v921, 0
        %v924 = vperm.slane %v921, 1
        %v927 = vmul.f32 %v910, %v923
        %v928 = vmul.f32 %v909, %v924
        %v929 = vadd.f32 %v918, %v927
        %v930 = vadd.f32 %v919, %v928
        %v931 = vadd.f32 %v861, %v929
        %v932 = vadd.f32 %v862, %v930
        %s933 = scalar_lea.vmem [#allocation5], 20
        %v934 = vld [vmem:[%s933] ss:$8 sm:$0x3]
        %v936 = vperm.slane %v934, 0
        %v937 = vperm.slane %v934, 1
        %v940 = vmul.f32 %v495, %v936
        %v941 = vmul.f32 %v496, %v937
        %s942 = scalar_lea.vmem [#allocation7], 20
        %v943 = vld [vmem:[%s942] ss:$8 sm:$0x3]
        %v945 = vperm.slane %v943, 0
        %v946 = vperm.slane %v943, 1
        %v949 = vmul.f32 %v505, %v945
        %v950 = vmul.f32 %v514, %v946
        %v951 = vadd.f32 %v940, %v949
        %v952 = vadd.f32 %v941, %v950
        %v953 = vadd.f32 %v896, %v951
        %v954 = vadd.f32 %v897, %v952
        %955 = vrot.lane.b32.xlu0 %v495, 127
        %v956 = vpop.permute.xlu0 %955
        %957 = vrot.lane.b32.xlu0 %v496, 127
        %v958 = vpop.permute.xlu0 %957
        %vm959 = vcmp.lt.s32.totalorder %v324, 127
        %v960 = vsel %vm959, %v956, %v958
        %v961 = vsel %vm959, %v958, %v956
        %962 = vrot.lane.b32.xlu0 %v505, 127
        %v963 = vpop.permute.xlu0 %962
        %964 = vrot.lane.b32.xlu0 %v514, 127
        %v965 = vpop.permute.xlu0 %964
        %v966 = vsel %vm959, %v963, %v965
        %v967 = vsel %vm959, %v965, %v963
        %s968 = scalar_lea.vmem [#allocation5], 21
        %v969 = vld [vmem:[%s968] ss:$8 sm:$0x3]
        %v971 = vperm.slane %v969, 0
        %v972 = vperm.slane %v969, 1
        %v975 = vmul.f32 %v960, %v971
        %v976 = vmul.f32 %v961, %v972
        %s977 = scalar_lea.vmem [#allocation7], 21
        %v978 = vld [vmem:[%s977] ss:$8 sm:$0x3]
        %v980 = vperm.slane %v978, 0
        %v981 = vperm.slane %v978, 1
        %v984 = vmul.f32 %v966, %v980
        %v985 = vmul.f32 %v967, %v981
        %v986 = vadd.f32 %v975, %v984
        %v987 = vadd.f32 %v976, %v985
        %v988 = vadd.f32 %v931, %v986
        %v989 = vadd.f32 %v932, %v987
        %990 = vrot.lane.b32.xlu0 %v495, 126
        %v991 = vpop.permute.xlu0 %990
        %992 = vrot.lane.b32.xlu0 %v496, 126
        %v993 = vpop.permute.xlu0 %992
        %vm994 = vcmp.lt.s32.totalorder %v324, 126
        %v995 = vsel %vm994, %v991, %v993
        %v996 = vsel %vm994, %v993, %v991
        %997 = vrot.lane.b32.xlu0 %v505, 126
        %v998 = vpop.permute.xlu0 %997
        %999 = vrot.lane.b32.xlu0 %v514, 126
        %v1000 = vpop.permute.xlu0 %999
        %v1001 = vsel %vm994, %v998, %v1000
        %v1002 = vsel %vm994, %v1000, %v998
        %s1003 = scalar_lea.vmem [#allocation5], 22
        %v1004 = vld [vmem:[%s1003] ss:$8 sm:$0x3]
        %v1006 = vperm.slane %v1004, 0
        %v1007 = vperm.slane %v1004, 1
        %v1010 = vmul.f32 %v995, %v1006
        %v1011 = vmul.f32 %v996, %v1007
        %s1012 = scalar_lea.vmem [#allocation7], 22
        %v1013 = vld [vmem:[%s1012] ss:$8 sm:$0x3]
        %v1015 = vperm.slane %v1013, 0
        %v1016 = vperm.slane %v1013, 1
        %v1019 = vmul.f32 %v1001, %v1015
        %v1020 = vmul.f32 %v1002, %v1016
        %v1021 = vadd.f32 %v1010, %v1019
        %v1022 = vadd.f32 %v1011, %v1020
        %v1023 = vadd.f32 %v953, %v1021
        %v1024 = vadd.f32 %v954, %v1022
        %1025 = vrot.lane.b32.xlu0 %v495, 114
        %v1026 = vpop.permute.xlu0 %1025
        %1027 = vrot.lane.b32.xlu0 %v496, 114
        %v1028 = vpop.permute.xlu0 %1027
        %vm1029 = vcmp.lt.s32.totalorder %v324, 114
        %v1030 = vsel %vm1029, %v1026, %v1028
        %v1031 = vsel %vm1029, %v1028, %v1026
        %1032 = vrot.lane.b32.xlu0 %v505, 114
        %v1033 = vpop.permute.xlu0 %1032
        %1034 = vrot.lane.b32.xlu0 %v514, 114
        %v1035 = vpop.permute.xlu0 %1034
        %v1036 = vsel %vm1029, %v1033, %v1035
        %v1037 = vsel %vm1029, %v1035, %v1033
        %s1038 = scalar_lea.vmem [#allocation5], 23
        %v1039 = vld [vmem:[%s1038] ss:$8 sm:$0x3]
        %v1041 = vperm.slane %v1039, 0
        %v1042 = vperm.slane %v1039, 1
        %v1045 = vmul.f32 %v1030, %v1041
        %v1046 = vmul.f32 %v1031, %v1042
        %s1047 = scalar_lea.vmem [#allocation7], 23
        %v1048 = vld [vmem:[%s1047] ss:$8 sm:$0x3]
        %v1050 = vperm.slane %v1048, 0
        %v1051 = vperm.slane %v1048, 1
        %v1054 = vmul.f32 %v1036, %v1050
        %v1055 = vmul.f32 %v1037, %v1051
        %v1056 = vadd.f32 %v1045, %v1054
        %v1057 = vadd.f32 %v1046, %v1055
        %v1058 = vadd.f32 %v988, %v1056
        %v1059 = vadd.f32 %v989, %v1057
        %1060 = vrot.lane.b32.xlu0 %v495, 113
        %v1061 = vpop.permute.xlu0 %1060
        %1062 = vrot.lane.b32.xlu0 %v496, 113
        %v1063 = vpop.permute.xlu0 %1062
        %vm1064 = vcmp.lt.s32.totalorder %v324, 113
        %v1065 = vsel %vm1064, %v1061, %v1063
        %v1066 = vsel %vm1064, %v1063, %v1061
        %1067 = vrot.lane.b32.xlu0 %v505, 113
        %v1068 = vpop.permute.xlu0 %1067
        %1069 = vrot.lane.b32.xlu0 %v514, 113
        %v1070 = vpop.permute.xlu0 %1069
        %v1071 = vsel %vm1064, %v1068, %v1070
        %v1072 = vsel %vm1064, %v1070, %v1068
        %s1073 = scalar_lea.vmem [#allocation5], 32
        %v1074 = vld [vmem:[%s1073] ss:$8 sm:$0x3]
        %v1076 = vperm.slane %v1074, 0
        %v1077 = vperm.slane %v1074, 1
        %v1080 = vmul.f32 %v1065, %v1076
        %v1081 = vmul.f32 %v1066, %v1077
        %s1082 = scalar_lea.vmem [#allocation7], 32
        %v1083 = vld [vmem:[%s1082] ss:$8 sm:$0x3]
        %v1085 = vperm.slane %v1083, 0
        %v1086 = vperm.slane %v1083, 1
        %v1089 = vmul.f32 %v1071, %v1085
        %v1090 = vmul.f32 %v1072, %v1086
        %v1091 = vadd.f32 %v1080, %v1089
        %v1092 = vadd.f32 %v1081, %v1090
        %v1093 = vadd.f32 %v1023, %v1091
        %v1094 = vadd.f32 %v1024, %v1092
        %1095 = vrot.lane.b32.xlu0 %v495, 112
        %v1096 = vpop.permute.xlu0 %1095
        %1097 = vrot.lane.b32.xlu0 %v496, 112
        %v1098 = vpop.permute.xlu0 %1097
        %vm1099 = vcmp.lt.s32.totalorder %v324, 112
        %v1100 = vsel %vm1099, %v1096, %v1098
        %v1101 = vsel %vm1099, %v1098, %v1096
        %1102 = vrot.lane.b32.xlu0 %v505, 112
        %v1103 = vpop.permute.xlu0 %1102
        %1104 = vrot.lane.b32.xlu0 %v514, 112
        %v1105 = vpop.permute.xlu0 %1104
        %v1106 = vsel %vm1099, %v1103, %v1105
        %v1107 = vsel %vm1099, %v1105, %v1103
        %s1108 = scalar_lea.vmem [#allocation5], 33
        %v1109 = vld [vmem:[%s1108] ss:$8 sm:$0x3]
        %v1111 = vperm.slane %v1109, 0
        %v1112 = vperm.slane %v1109, 1
        %v1115 = vmul.f32 %v1100, %v1111
        %v1116 = vmul.f32 %v1101, %v1112
        %s1117 = scalar_lea.vmem [#allocation7], 33
        %v1118 = vld [vmem:[%s1117] ss:$8 sm:$0x3]
        %v1120 = vperm.slane %v1118, 0
        %v1121 = vperm.slane %v1118, 1
        %v1124 = vmul.f32 %v1106, %v1120
        %v1125 = vmul.f32 %v1107, %v1121
        %v1126 = vadd.f32 %v1115, %v1124
        %v1127 = vadd.f32 %v1116, %v1125
        %v1128 = vadd.f32 %v1058, %v1126
        %v1129 = vadd.f32 %v1059, %v1127
        %1130 = vrot.lane.b32.xlu0 %v495, 111
        %v1131 = vpop.permute.xlu0 %1130
        %1132 = vrot.lane.b32.xlu0 %v496, 111
        %v1133 = vpop.permute.xlu0 %1132
        %vm1134 = vcmp.lt.s32.totalorder %v324, 111
        %v1135 = vsel %vm1134, %v1131, %v1133
        %v1136 = vsel %vm1134, %v1133, %v1131
        %1137 = vrot.lane.b32.xlu0 %v505, 111
        %v1138 = vpop.permute.xlu0 %1137
        %1139 = vrot.lane.b32.xlu0 %v514, 111
        %v1140 = vpop.permute.xlu0 %1139
        %v1141 = vsel %vm1134, %v1138, %v1140
        %v1142 = vsel %vm1134, %v1140, %v1138
        %s1143 = scalar_lea.vmem [#allocation5], 34
        %v1144 = vld [vmem:[%s1143] ss:$8 sm:$0x3]
        %v1146 = vperm.slane %v1144, 0
        %v1147 = vperm.slane %v1144, 1
        %v1150 = vmul.f32 %v1135, %v1146
        %v1151 = vmul.f32 %v1136, %v1147
        %s1152 = scalar_lea.vmem [#allocation7], 34
        %v1153 = vld [vmem:[%s1152] ss:$8 sm:$0x3]
        %v1155 = vperm.slane %v1153, 0
        %v1156 = vperm.slane %v1153, 1
        %v1159 = vmul.f32 %v1141, %v1155
        %v1160 = vmul.f32 %v1142, %v1156
        %v1161 = vadd.f32 %v1150, %v1159
        %v1162 = vadd.f32 %v1151, %v1160
        %v1163 = vadd.f32 %v1093, %v1161
        %v1164 = vadd.f32 %v1094, %v1162
        %1165 = vrot.lane.b32.xlu0 %v495, 110
        %v1166 = vpop.permute.xlu0 %1165
        %1167 = vrot.lane.b32.xlu0 %v496, 110
        %v1168 = vpop.permute.xlu0 %1167
        %vm1169 = vcmp.lt.s32.totalorder %v324, 110
        %v1170 = vsel %vm1169, %v1166, %v1168
        %v1171 = vsel %vm1169, %v1168, %v1166
        %1172 = vrot.lane.b32.xlu0 %v505, 110
        %v1173 = vpop.permute.xlu0 %1172
        %1174 = vrot.lane.b32.xlu0 %v514, 110
        %v1175 = vpop.permute.xlu0 %1174
        %v1176 = vsel %vm1169, %v1173, %v1175
        %v1177 = vsel %vm1169, %v1175, %v1173
        %s1178 = scalar_lea.vmem [#allocation5], 35
        %v1179 = vld [vmem:[%s1178] ss:$8 sm:$0x3]
        %v1181 = vperm.slane %v1179, 0
        %v1182 = vperm.slane %v1179, 1
        %v1185 = vmul.f32 %v1170, %v1181
        %v1186 = vmul.f32 %v1171, %v1182
        %s1187 = scalar_lea.vmem [#allocation7], 35
        %v1188 = vld [vmem:[%s1187] ss:$8 sm:$0x3]
        %v1190 = vperm.slane %v1188, 0
        %v1191 = vperm.slane %v1188, 1
        %v1194 = vmul.f32 %v1176, %v1190
        %v1195 = vmul.f32 %v1177, %v1191
        %v1196 = vadd.f32 %v1185, %v1194
        %v1197 = vadd.f32 %v1186, %v1195
        %v1198 = vadd.f32 %v1128, %v1196
        %v1199 = vadd.f32 %v1129, %v1197
        %1200 = vrot.lane.b32.xlu0 %v495, 98
        %v1201 = vpop.permute.xlu0 %1200
        %1202 = vrot.lane.b32.xlu0 %v496, 98
        %v1203 = vpop.permute.xlu0 %1202
        %vm1204 = vcmp.lt.s32.totalorder %v324, 98
        %v1205 = vsel %vm1204, %v1201, %v1203
        %v1206 = vsel %vm1204, %v1203, %v1201
        %1207 = vrot.lane.b32.xlu0 %v505, 98
        %v1208 = vpop.permute.xlu0 %1207
        %1209 = vrot.lane.b32.xlu0 %v514, 98
        %v1210 = vpop.permute.xlu0 %1209
        %v1211 = vsel %vm1204, %v1208, %v1210
        %v1212 = vsel %vm1204, %v1210, %v1208
        %s1213 = scalar_lea.vmem [#allocation5], 36
        %v1214 = vld [vmem:[%s1213] ss:$8 sm:$0x3]
        %v1216 = vperm.slane %v1214, 0
        %v1217 = vperm.slane %v1214, 1
        %v1220 = vmul.f32 %v1205, %v1216
        %v1221 = vmul.f32 %v1206, %v1217
        %s1222 = scalar_lea.vmem [#allocation7], 36
        %v1223 = vld [vmem:[%s1222] ss:$8 sm:$0x3]
        %v1225 = vperm.slane %v1223, 0
        %v1226 = vperm.slane %v1223, 1
        %v1229 = vmul.f32 %v1211, %v1225
        %v1230 = vmul.f32 %v1212, %v1226
        %v1231 = vadd.f32 %v1220, %v1229
        %v1232 = vadd.f32 %v1221, %v1230
        %v1233 = vadd.f32 %v1163, %v1231
        %v1234 = vadd.f32 %v1164, %v1232
        %1235 = vrot.lane.b32.xlu0 %v495, 97
        %v1236 = vpop.permute.xlu0 %1235
        %1237 = vrot.lane.b32.xlu0 %v496, 97
        %v1238 = vpop.permute.xlu0 %1237
        %vm1239 = vcmp.lt.s32.totalorder %v324, 97
        %v1240 = vsel %vm1239, %v1236, %v1238
        %v1241 = vsel %vm1239, %v1238, %v1236
        %1242 = vrot.lane.b32.xlu0 %v505, 97
        %v1243 = vpop.permute.xlu0 %1242
        %1244 = vrot.lane.b32.xlu0 %v514, 97
        %v1245 = vpop.permute.xlu0 %1244
        %v1246 = vsel %vm1239, %v1243, %v1245
        %v1247 = vsel %vm1239, %v1245, %v1243
        %s1248 = scalar_lea.vmem [#allocation5], 37
        %v1249 = vld [vmem:[%s1248] ss:$8 sm:$0x3]
        %v1251 = vperm.slane %v1249, 0
        %v1252 = vperm.slane %v1249, 1
        %v1255 = vmul.f32 %v1240, %v1251
        %v1256 = vmul.f32 %v1241, %v1252
        %s1257 = scalar_lea.vmem [#allocation7], 37
        %v1258 = vld [vmem:[%s1257] ss:$8 sm:$0x3]
        %v1260 = vperm.slane %v1258, 0
        %v1261 = vperm.slane %v1258, 1
        %v1264 = vmul.f32 %v1246, %v1260
        %v1265 = vmul.f32 %v1247, %v1261
        %v1266 = vadd.f32 %v1255, %v1264
        %v1267 = vadd.f32 %v1256, %v1265
        %v1268 = vadd.f32 %v1198, %v1266
        %v1269 = vadd.f32 %v1199, %v1267
        %1270 = vrot.lane.b32.xlu0 %v495, 96
        %v1271 = vpop.permute.xlu0 %1270
        %1272 = vrot.lane.b32.xlu0 %v496, 96
        %v1273 = vpop.permute.xlu0 %1272
        %vm1274 = vcmp.lt.s32.totalorder %v324, 96
        %v1275 = vsel %vm1274, %v1271, %v1273
        %v1276 = vsel %vm1274, %v1273, %v1271
        %1277 = vrot.lane.b32.xlu0 %v505, 96
        %v1278 = vpop.permute.xlu0 %1277
        %1279 = vrot.lane.b32.xlu0 %v514, 96
        %v1280 = vpop.permute.xlu0 %1279
        %v1281 = vsel %vm1274, %v1278, %v1280
        %v1282 = vsel %vm1274, %v1280, %v1278
        %s1283 = scalar_lea.vmem [#allocation5], 38
        %v1284 = vld [vmem:[%s1283] ss:$8 sm:$0x3]
        %v1286 = vperm.slane %v1284, 0
        %v1287 = vperm.slane %v1284, 1
        %v1290 = vmul.f32 %v1275, %v1286
        %v1291 = vmul.f32 %v1276, %v1287
        %s1292 = scalar_lea.vmem [#allocation7], 38
        %v1293 = vld [vmem:[%s1292] ss:$8 sm:$0x3]
        %v1295 = vperm.slane %v1293, 0
        %v1296 = vperm.slane %v1293, 1
        %v1299 = vmul.f32 %v1281, %v1295
        %v1300 = vmul.f32 %v1282, %v1296
        %v1301 = vadd.f32 %v1290, %v1299
        %v1302 = vadd.f32 %v1291, %v1300
        %v1303 = vadd.f32 %v1233, %v1301
        %v1304 = vadd.f32 %v1234, %v1302
        %1305 = vrot.lane.b32.xlu0 %v495, 95
        %v1306 = vpop.permute.xlu0 %1305
        %1307 = vrot.lane.b32.xlu0 %v496, 95
        %v1308 = vpop.permute.xlu0 %1307
        %vm1309 = vcmp.lt.s32.totalorder %v324, 95
        %v1310 = vsel %vm1309, %v1306, %v1308
        %v1311 = vsel %vm1309, %v1308, %v1306
        %1312 = vrot.lane.b32.xlu0 %v505, 95
        %v1313 = vpop.permute.xlu0 %1312
        %1314 = vrot.lane.b32.xlu0 %v514, 95
        %v1315 = vpop.permute.xlu0 %1314
        %v1316 = vsel %vm1309, %v1313, %v1315
        %v1317 = vsel %vm1309, %v1315, %v1313
        %s1318 = scalar_lea.vmem [#allocation5], 39
        %v1319 = vld [vmem:[%s1318] ss:$8 sm:$0x3]
        %v1321 = vperm.slane %v1319, 0
        %v1322 = vperm.slane %v1319, 1
        %v1325 = vmul.f32 %v1310, %v1321
        %v1326 = vmul.f32 %v1311, %v1322
        %s1327 = scalar_lea.vmem [#allocation7], 39
        %v1328 = vld [vmem:[%s1327] ss:$8 sm:$0x3]
        %v1330 = vperm.slane %v1328, 0
        %v1331 = vperm.slane %v1328, 1
        %v1334 = vmul.f32 %v1316, %v1330
        %v1335 = vmul.f32 %v1317, %v1331
        %v1336 = vadd.f32 %v1325, %v1334
        %v1337 = vadd.f32 %v1326, %v1335
        %v1338 = vadd.f32 %v1268, %v1336
        %v1339 = vadd.f32 %v1269, %v1337
        %1340 = vrot.lane.b32.xlu0 %v495, 94
        %v1341 = vpop.permute.xlu0 %1340
        %1342 = vrot.lane.b32.xlu0 %v496, 94
        %v1343 = vpop.permute.xlu0 %1342
        %vm1344 = vcmp.lt.s32.totalorder %v324, 94
        %v1345 = vsel %vm1344, %v1341, %v1343
        %v1346 = vsel %vm1344, %v1343, %v1341
        %1347 = vrot.lane.b32.xlu0 %v505, 94
        %v1348 = vpop.permute.xlu0 %1347
        %1349 = vrot.lane.b32.xlu0 %v514, 94
        %v1350 = vpop.permute.xlu0 %1349
        %v1351 = vsel %vm1344, %v1348, %v1350
        %v1352 = vsel %vm1344, %v1350, %v1348
        %s1353 = scalar_lea.vmem [#allocation5], 48
        %v1354 = vld [vmem:[%s1353] ss:$8 sm:$0x3]
        %v1356 = vperm.slane %v1354, 0
        %v1357 = vperm.slane %v1354, 1
        %v1360 = vmul.f32 %v1345, %v1356
        %v1361 = vmul.f32 %v1346, %v1357
        %s1362 = scalar_lea.vmem [#allocation7], 48
        %v1363 = vld [vmem:[%s1362] ss:$8 sm:$0x3]
        %v1365 = vperm.slane %v1363, 0
        %v1366 = vperm.slane %v1363, 1
        %v1369 = vmul.f32 %v1351, %v1365
        %v1370 = vmul.f32 %v1352, %v1366
        %v1371 = vadd.f32 %v1360, %v1369
        %v1372 = vadd.f32 %v1361, %v1370
        %v1373 = vadd.f32 %v1303, %v1371
        %v1374 = vadd.f32 %v1304, %v1372
        %v1375 = vadd.f32 %v1373, %v1338
        %v1376 = vadd.f32 %v1374, %v1339
        %v1377 = vsub.f32 0.0, %v1375
        %v1378 = vsub.f32 0.0, %v1376
        %v1379 = vmul.f32 %v1377, 1.442695
        %v1380 = vpow.pop %v1379
        %v1381 = vmul.f32 %v1378, 1.442695
        %v1382 = vpow.pop %v1381
        %v1383 = vadd.f32 %v1380, 1.0
        %v1384 = vadd.f32 %v1382, 1.0
        %v1385 = vrcp.pop %v1383
        %v1386 = vmul.f32 %v1383, %v1385
        %v1387 = vsub.f32 1.0, %v1386
        %v1388 = vmul.f32 %v1385, %v1387
        %v1389 = vadd.f32 %v1385, %v1388
        %vm1390 = vweird.f32 %v1383
        %vm1391 = vweird.f32 %v1385
        %vm1392 = vmor %vm1390, %vm1391
        %v1393 = vsel %vm1392, %v1385, %v1389
        %v1394 = vand.u32 2147483647, %v1383
        %vm1395 = vcmp.eq.f32.partialorder %v1394, 8.507059e+37
        %v1396 = vand.u32 %v1383, 2147483648
        %v1397 = vor.u32 1.1754944e-38, %v1396
        %v1398 = vsel %vm1395, %v1397, %v1393
        %v1399 = vmul.f32 1.0, %v1398
        %v1400 = vrcp.pop %v1384
        %v1401 = vmul.f32 %v1384, %v1400
        %v1402 = vsub.f32 1.0, %v1401
        %v1403 = vmul.f32 %v1400, %v1402
        %v1404 = vadd.f32 %v1400, %v1403
        %vm1405 = vweird.f32 %v1384
        %vm1406 = vweird.f32 %v1400
        %vm1407 = vmor %vm1405, %vm1406
        %v1408 = vsel %vm1407, %v1400, %v1404
        %v1409 = vand.u32 2147483647, %v1384
        %vm1410 = vcmp.eq.f32.partialorder %v1409, 8.507059e+37
        %v1411 = vand.u32 %v1384, 2147483648
        %v1412 = vor.u32 1.1754944e-38, %v1411
        %v1413 = vsel %vm1410, %v1412, %v1408
        %v1414 = vmul.f32 1.0, %v1413
        %v1415 = vperm.slane %v1399, 0
        %v1416 = vperm.slane %v1414, 0
        %v1417 = vmul.f32 %v469, %v1415
        %v1418 = vmul.f32 %v470, %v1416
        %v1419 = vmul.f32 %v471, %v1415
        %v1420 = vmul.f32 %v472, %v1416
        %v1421 = vmul.f32 %v473, %v1415
        %v1422 = vmul.f32 %v474, %v1416
        %v1423 = vmul.f32 %v475, %v1415
        %v1424 = vmul.f32 %v476, %v1416
        %1425 = vst [vmem:[%s277] sm:$0xff] %v1417
        %1426 = vst [vmem:[%s277 + $0x8] sm:$0xff] %v1418
        %1427 = vst [vmem:[%s277 + $0x10] sm:$0xff] %v1419
        %1428 = vst [vmem:[%s277 + $0x18] sm:$0xff] %v1420
        %1429 = vst [vmem:[%s277 + $0x20] sm:$0xff] %v1421
        %1430 = vst [vmem:[%s277 + $0x28] sm:$0xff] %v1422
        %1431 = vst [vmem:[%s277 + $0x30] sm:$0xff] %v1423
        %1432 = vst [vmem:[%s277 + $0x38] sm:$0xff] %v1424
        %s1433 = sand.u32 %s141, 1
        %s1434 = scalar_lea.sflag [#allocation4], %s1433
        %s1435 = sand.u32 %s141, 1
        %s1436 = smul.addr %s1435, 64
        %s1437 = scalar_lea.vmem [#allocation8], %s1436
        // Predicated region
        $region53: #{tpu_custom_call.1} parent=39 // pred_check
          %p1438 = pneg %p151
        $region54: #{tpu_custom_call.1} parent=39 // pred_check_branch
          %1440 = sbr.rel (%p1438) target = $region56
        $region55: #{tpu_custom_call.1} parent=39 // pred_region
          %1442 = vsyncadd %s1434, 0
          %s1443 = smul.addr %s23, 8
          %s1444 = smul.addr %s1443, 8
          %s1445 = scalar_lea.hbm %s5, %s1444
          %s1446 = sshll.u32 %s1437, 4
          %s1447 = int_to_ptr.vmem [resolvable:$true] %s1446
          %s1448 = sshll.u32 %s1445, 4
          %s1449 = int_to_ptr.hbm [resolvable:$true] %s1448
          %1454 = dma.vmem_to_hbm [thread:$0]  %s1447, 1024, %s1449, %s1434, 256, 256, 16
        $region56: #{tpu_custom_call.1} parent=39 // pred_fallthru
          _
      $region40: #{tpu_custom_call.1} parent=5 // pred_fallthru
        _
      %p1455 = scmp.le.s32.totalorder 2, %s18
      // Predicated region
      $region57: #{tpu_custom_call.1} parent=5 // pred_check
        %p1456 = pneg %p1455
      $region58: #{tpu_custom_call.1} parent=5 // pred_check_branch
        %1458 = sbr.rel (%p1456) target = $region60
      $region59: #{tpu_custom_call.1} parent=5 // pred_region
        %s1459 = ssub.s32 %s18, 2
        // Predicated region
        $region61: #{tpu_custom_call.1} parent=59 // pred_check
          %p1460 = pneg %p157
        $region62: #{tpu_custom_call.1} parent=59 // pred_check_branch
          %1462 = sbr.rel (%p1460) target = $region64
        $region63: #{tpu_custom_call.1} parent=59 // pred_region
          %s1463 = sand.u32 %s142, 1
          %s1464 = scalar_lea.sflag [#allocation4], %s1463
          %s1465 = sand.u32 %s142, 1
          %s1466 = smul.addr %s1465, 64
          %s1467 = scalar_lea.vmem [#allocation8], %s1466
          %1469 = dma.done %s1464, 1024
        $region64: #{tpu_custom_call.1} parent=59 // pred_fallthru
          _
      $region60: #{tpu_custom_call.1} parent=5 // pred_fallthru
        _
    $region6: #{tpu_custom_call.1} parent=1 // loop_footer
      %s22 = sadd.s32 1, %s18
    $region7: #{tpu_custom_call.1} parent=1 // loop_footer_branch
      %17 = sbr.rel target = $region3
    $region8: #{tpu_custom_call.1} parent=1 // loop_exit
      _
    %1470 = vsyncpa [#allocation3], 1
    %s1471 = scalar_lea.sflag [#allocation3], 1
    %1472 = vsyncpa %s1471, 1
    %1473 = vsyncpa [#allocation6], 1
    %1474 = vsyncpa [#allocation4], 1
    %s1475 = scalar_lea.sflag [#allocation4], 1
    %1476 = vsyncpa %s1475, 1

</llo_original>
